<compile_context>
chip_gen: v7x
topology: tpu7x:2x2x1
jax: 0.10.0
libtpu: 0.0.40
codegen_flags: <defaults>
</compile_context>

<pallas_src>
import functools

import jax
import jax.numpy as jnp
from jax import lax
from jax.experimental import pallas as pl
from jax.experimental.pallas import tpu as pltpu

S_SCALE = 1.8
NORM_EPS = 1e-12  # matches F.normalize default eps


def _round_up(x, m):
    return ((x + m - 1) // m) * m


# ---------------- kernel 1: dH = d * F.normalize(X @ W), row strips ---------
def _proj_norm_kernel(x_ref, w_ref, d_ref, o_ref):
    H = jnp.dot(x_ref[...], w_ref[...], preferred_element_type=jnp.float32)
    # F.normalize(dim=1): H / max(||H||, eps) == H * rsqrt(max(||H||^2, eps^2))
    ss = jnp.sum(H * H, axis=1, keepdims=True)
    H = H * lax.rsqrt(jnp.maximum(ss, NORM_EPS * NORM_EPS))
    o_ref[...] = (d_ref[...] * H).astype(o_ref.dtype)


def _proj_norm(X, W, d, tm):
    Np, Fin = X.shape
    Fout = W.shape[1]
    return pl.pallas_call(
        _proj_norm_kernel,
        out_shape=jax.ShapeDtypeStruct((Np, Fout), jnp.float32),
        grid_spec=pltpu.PrefetchScalarGridSpec(
            num_scalar_prefetch=0,
            grid=(Np // tm,),
            in_specs=[pl.BlockSpec((tm, Fin), lambda i: (i, 0)),
                      pl.BlockSpec((Fin, Fout), lambda i: (0, 0)),
                      pl.BlockSpec((tm, 1), lambda i: (i, 0))],
            out_specs=pl.BlockSpec((tm, Fout), lambda i: (i, 0)),
        ),
        compiler_params=pltpu.CompilerParams(
            dimension_semantics=("parallel",)),
    )(X, W, d)


# -------- kernel 2: Y = act( s*d * ((A + I) @ dH) ), tiled SpMM -------------
def _spmm_kernel(a_ref, dhk_ref, dhi_ref, sd_ref, o_ref, acc_ref, *, relu):
    k = pl.program_id(1)

    @pl.when(k == 0)
    def _():
        # (A + I) @ dH  ==  A @ dH + dH   -> seed accumulator with the self-
        # loop term (the row strip of dH itself).
        acc_ref[...] = dhi_ref[...]

    # A block is stored bf16 ({0,1} -> exact); upcast so the math stays f32.
    acc_ref[...] += jnp.dot(a_ref[...].astype(jnp.float32), dhk_ref[...],
                            preferred_element_type=jnp.float32)

    @pl.when(k == pl.num_programs(1) - 1)
    def _():
        y = sd_ref[...] * acc_ref[...]
        if relu:
            y = jnp.maximum(y, 0.0)
        o_ref[...] = y.astype(o_ref.dtype)


def _spmm(A_bf16, dH, sd, tm, tk, relu):
    Np = A_bf16.shape[0]
    F = dH.shape[1]
    return pl.pallas_call(
        functools.partial(_spmm_kernel, relu=relu),
        out_shape=jax.ShapeDtypeStruct((Np, F), jnp.float32),
        grid_spec=pltpu.PrefetchScalarGridSpec(
            num_scalar_prefetch=0,
            grid=(Np // tm, Np // tk),
            in_specs=[pl.BlockSpec((tm, tk), lambda i, k: (i, k)),   # A block
                      pl.BlockSpec((tk, F), lambda i, k: (k, 0)),    # dH (K rows)
                      pl.BlockSpec((tm, F), lambda i, k: (i, 0)),    # dH (own rows)
                      pl.BlockSpec((tm, 1), lambda i, k: (i, 0))],   # s*d
            out_specs=pl.BlockSpec((tm, F), lambda i, k: (i, 0)),
            scratch_shapes=[pltpu.VMEM((tm, F), jnp.float32)],
        ),
        compiler_params=pltpu.CompilerParams(
            dimension_semantics=("parallel", "arbitrary")),
    )(A_bf16, dH, dH, sd)


# ---------------- kernel 3: sigmoid(enc @ enc.T), tiled decoder -------------
def _decoder_kernel(ei_ref, ej_ref, o_ref):
    # enc @ enc.T without an explicit transpose: contract both on last axis.
    logits = lax.dot_general(ei_ref[...], ej_ref[...],
                             (((1,), (1,)), ((), ())),
                             preferred_element_type=jnp.float32)
    # sigmoid(x) == 0.5 * tanh(0.5 * x) + 0.5 : one EUP op + two VPU ops,
    # no VALU Newton-divide (decoder is writeback-bound, keep VALU free).
    o_ref[...] = (0.5 * jnp.tanh(0.5 * logits) + 0.5).astype(o_ref.dtype)


def _decode(enc, dec_tile):
    Np, L = enc.shape
    grid = (pl.cdiv(Np, dec_tile), pl.cdiv(Np, dec_tile))
    return pl.pallas_call(
        _decoder_kernel,
        out_shape=jax.ShapeDtypeStruct((Np, Np), jnp.float32),
        grid_spec=pltpu.PrefetchScalarGridSpec(
            num_scalar_prefetch=0,
            grid=grid,
            in_specs=[pl.BlockSpec((dec_tile, L), lambda i, j: (i, 0)),
                      pl.BlockSpec((dec_tile, L), lambda i, j: (j, 0))],
            out_specs=pl.BlockSpec((dec_tile, dec_tile), lambda i, j: (i, j)),
        ),
        compiler_params=pltpu.CompilerParams(
            dimension_semantics=("parallel", "parallel")),
    )(enc, enc)


# -------------------------------- wrapper -----------------------------------
def gncae_forward(A, X, W1, W2):
    """sigmoid(enc @ enc.T) for the GNCAE forward (need_proj=False path)."""
    N = A.shape[0]
    Fin, Hd = W1.shape
    L = W2.shape[1]

    # Pad node count to a multiple of 128 and all feature dims to multiples of
    # 128 (lane-dense stores / MXU-depth contractions). Zero padding is exact:
    # padded A rows/cols, X rows and W rows/cols produce exactly-zero padded
    # enc rows/cols, so the [:N, :N] block is unchanged.
    Np = max(128, _round_up(N, 128))
    Fin_p = max(128, _round_up(Fin, 128))
    H_p = max(128, _round_up(Hd, 128))
    L_p = max(128, _round_up(L, 128))

    A_f32 = A.astype(jnp.float32)
    # Precompute d = rsqrt(rowsum(A) + 1) once (the +I of the normalization);
    # avoids a full extra pass over A inside the kernels.
    d = lax.rsqrt(jnp.sum(A_f32, axis=1, keepdims=True) + 1.0)      # (N, 1)
    d_p = jnp.pad(d, ((0, Np - N), (0, 0)), constant_values=1.0)
    sd_p = S_SCALE * d_p

    # Adjacency streamed as bf16 ({0,1} values -> exact cast, half the bytes).
    A_p = jnp.pad(A_f32, ((0, Np - N), (0, Np - N))).astype(jnp.bfloat16)
    X_p = jnp.pad(X.astype(jnp.float32), ((0, Np - N), (0, Fin_p - Fin)))
    W1_p = jnp.pad(W1.astype(jnp.float32), ((0, Fin_p - Fin), (0, H_p - Hd)))
    W2_p = jnp.pad(W2.astype(jnp.float32), ((0, H_p - Hd), (0, L_p - L)))

    # Encoder tile: largest of {512, 256, 128} that divides Np (Np % 128 == 0).
    if Np % 512 == 0:
        tm = 512
    elif Np % 256 == 0:
        tm = 256
    else:
        tm = 128
    tk = tm

    # ---- layer 1 (GNCN + ReLU) ----
    dH1 = _proj_norm(X_p, W1_p, d_p, tm)                 # (Np, H_p)
    Z1 = _spmm(A_p, dH1, sd_p, tm, tk, relu=True)        # (Np, H_p)

    # ---- layer 2 (GNCN) ----
    dH2 = _proj_norm(Z1, W2_p, d_p, tm)                  # (Np, L_p)
    enc = _spmm(A_p, dH2, sd_p, tm, tk, relu=False)      # (Np, L_p)

    # ---- decoder: sigmoid(enc @ enc.T), 512-wide output tiles, cdiv grid ----
    dec_tile = min(512, Np)
    out_p = _decode(enc, dec_tile)                        # (Np, Np)

    # TODO(synk): need_proj=True branch (2-layer MLP projection head) not
    # emitted; default forward path (need_proj=False) only.
    return out_p[:N, :N]


# ------------------------------- reference ----------------------------------
def gncae_reference(A, X, W1, W2):
    """Pure-JAX reference mirroring the PyTorch forward."""
    N = A.shape[0]
    A = A + jnp.eye(N, dtype=A.dtype)
    d = jnp.power(jnp.sum(A, axis=1), -0.5)
    A_hat = d[:, None] * A * d[None, :]

    def gncn(Xi, W, relu):
        H = Xi @ W
        nrm = jnp.sqrt(jnp.sum(H * H, axis=1, keepdims=True))
        H = H / jnp.maximum(nrm, NORM_EPS)
        Y = S_SCALE * (A_hat @ H)
        return jnp.maximum(Y, 0.0) if relu else Y

    enc = gncn(gncn(X, W1, True), W2, False)
    return jax.nn.sigmoid(enc @ enc.T)


if __name__ == "__main__":
    key = jax.random.PRNGKey(0)
    k_a, k_x, k_w1, k_w2 = jax.random.split(key, 4)

    # small graph: N nodes, in_feat -> hid -> latent
    N, in_feat, hid, latent = 64, 16, 32, 16

    # symmetric binary adjacency (no self loops; normalize() adds them)
    A_upper = (jax.random.uniform(k_a, (N, N)) < 0.2).astype(jnp.float32)
    A = jnp.triu(A_upper, 1)
    A = A + A.T

    X = jax.random.normal(k_x, (N, in_feat), dtype=jnp.float32)

    # deterministic Linear-style init: U(-1/sqrt(fan_in), 1/sqrt(fan_in)),
    # stored pre-transposed as (in, out)
    b1 = 1.0 / jnp.sqrt(in_feat)
    b2 = 1.0 / jnp.sqrt(hid)
    W1 = jax.random.uniform(k_w1, (in_feat, hid), minval=-b1, maxval=b1,
                            dtype=jnp.float32)
    W2 = jax.random.uniform(k_w2, (hid, latent), minval=-b2, maxval=b2,
                            dtype=jnp.float32)

    fwd = jax.jit(gncae_forward)
    out = fwd(A, X, W1, W2)
    out = jax.block_until_ready(out)

    ref = gncae_reference(A, X, W1, W2)
    assert out.shape == (N, N)
    err = float(jnp.max(jnp.abs(out - ref)))
    assert jnp.allclose(out, ref, atol=1e-4, rtol=1e-4), err

    print("KERNEL_OK")
</pallas_src>

<mosaic_0001>
module attributes {stable_mosaic.version = 11 : i64} {
  func.func @_proj_norm_kernel(%arg0: i32, %arg1: memref<128x128xf32, #tpu.memory_space<vmem>>, %arg2: memref<128x128xf32, #tpu.memory_space<vmem>>, %arg3: memref<128x1xf32, #tpu.memory_space<vmem>>, %arg4: memref<128x128xf32, #tpu.memory_space<vmem>>) attributes {dimension_semantics = [#tpu.dimension_semantics<parallel>], iteration_bounds = array<i64: 1>, scalar_prefetch = 0 : i64, scratch_operands = 0 : i64, tpu.core_type = #tpu.core_type<tc>, window_params = [{transform_indices = @transform_0, window_bounds = array<i64: 128, 128>}, {pipeline_mode = #tpu.pipeline_mode<synchronous>, transform_indices = @transform_1, window_bounds = array<i64: 128, 128>}, {transform_indices = @transform_2, window_bounds = array<i64: 128, 1>}, {transform_indices = @transform_3, window_bounds = array<i64: 128, 128>}]} {
    %c0 = arith.constant 0 : index
    %c0_0 = arith.constant 0 : index
    %0 = vector.load %arg1[%c0, %c0_0] : memref<128x128xf32, #tpu.memory_space<vmem>>, vector<128x128xf32>
    %c0_1 = arith.constant 0 : index
    %c0_2 = arith.constant 0 : index
    %1 = vector.load %arg2[%c0_1, %c0_2] : memref<128x128xf32, #tpu.memory_space<vmem>>, vector<128x128xf32>
    %cst = arith.constant dense<0.000000e+00> : vector<128x128xf32>
    %2 = tpu.matmul %0, %1, %cst {dimension_numbers = #tpu.dot_dimension_numbers<[1], [0], [0], [1], [0, 0, 1, 1], [], []>} : vector<128x128xf32>, vector<128x128xf32>, vector<128x128xf32> -> vector<128x128xf32>
    %3 = arith.mulf %2, %2 : vector<128x128xf32>
    %cst_3 = arith.constant dense<0.000000e+00> : vector<128xf32>
    %4 = vector.multi_reduction <add>, %3, %cst_3 [1] : vector<128x128xf32> to vector<128xf32>
    %5 = vector.shape_cast %4 : vector<128xf32> to vector<128x1xf32>
    %cst_4 = arith.constant 1.000000e-24 : f32
    %6 = vector.broadcast %cst_4 : f32 to vector<128x1xf32>
    %7 = arith.maximumf %5, %6 : vector<128x1xf32>
    %8 = math.rsqrt %7 : vector<128x1xf32>
    %9 = vector.broadcast %8 : vector<128x1xf32> to vector<128x128xf32>
    %10 = arith.mulf %2, %9 : vector<128x128xf32>
    %c0_5 = arith.constant 0 : index
    %c0_6 = arith.constant 0 : index
    %11 = vector.load %arg3[%c0_5, %c0_6] : memref<128x1xf32, #tpu.memory_space<vmem>>, vector<128x1xf32>
    %12 = vector.broadcast %11 : vector<128x1xf32> to vector<128x128xf32>
    %13 = arith.mulf %12, %10 : vector<128x128xf32>
    %c0_7 = arith.constant 0 : index
    %c0_8 = arith.constant 0 : index
    %14 = vector.load %arg4[%c0_7, %c0_8] : memref<128x128xf32, #tpu.memory_space<vmem>>, vector<128x128xf32>
    tpu.vector_store %arg4[%c0_7, %c0_8], %13 {strides = array<i32>} : memref<128x128xf32, #tpu.memory_space<vmem>>, vector<128x128xf32>,
    return
  }
  func.func @transform_0(%arg0: i32) -> (i32, i32) {
    %c0_i32 = arith.constant 0 : i32
    %c0_i32_0 = arith.constant 0 : i32
    return %arg0, %c0_i32 : i32, i32
  }
  func.func @transform_1(%arg0: i32) -> (i32, i32) {
    %c0_i32 = arith.constant 0 : i32
    %c0_i32_0 = arith.constant 0 : i32
    %c0_i32_1 = arith.constant 0 : i32
    return %c0_i32, %c0_i32_0 : i32, i32
  }
  func.func @transform_2(%arg0: i32) -> (i32, i32) {
    %c0_i32 = arith.constant 0 : i32
    %c0_i32_0 = arith.constant 0 : i32
    return %arg0, %c0_i32 : i32, i32
  }
  func.func @transform_3(%arg0: i32) -> (i32, i32) {
    %c0_i32 = arith.constant 0 : i32
    %c0_i32_0 = arith.constant 0 : i32
    return %arg0, %c0_i32 : i32, i32
  }
}

module attributes {stable_mosaic.version = 11 : i64} {
  func.func @_spmm_kernel(%arg0: i32, %arg1: i32, %arg2: memref<128x128xbf16, #tpu.memory_space<vmem>>, %arg3: memref<128x128xf32, #tpu.memory_space<vmem>>, %arg4: memref<128x128xf32, #tpu.memory_space<vmem>>, %arg5: memref<128x1xf32, #tpu.memory_space<vmem>>, %arg6: memref<128x128xf32, #tpu.memory_space<vmem>>, %arg7: memref<128x128xf32, #tpu.memory_space<vmem>>) attributes {dimension_semantics = [#tpu.dimension_semantics<parallel>, #tpu.dimension_semantics<arbitrary>], iteration_bounds = array<i64: 1, 1>, scalar_prefetch = 0 : i64, scratch_operands = 1 : i64, tpu.core_type = #tpu.core_type<tc>, window_params = [{transform_indices = @transform_0, window_bounds = array<i64: 128, 128>}, {transform_indices = @transform_1, window_bounds = array<i64: 128, 128>}, {transform_indices = @transform_2, window_bounds = array<i64: 128, 128>}, {transform_indices = @transform_3, window_bounds = array<i64: 128, 1>}, {transform_indices = @transform_4, window_bounds = array<i64: 128, 128>}]} {
    %c0_i32 = arith.constant 0 : i32
    %0 = arith.cmpi eq, %arg1, %c0_i32 : i32
    %1 = arith.extui %0 : i1 to i32
    %c0_i32_0 = arith.constant 0 : i32
    %2 = arith.cmpi ne, %1, %c0_i32_0 : i32
    scf.if %2 {
      %c0_10 = arith.constant 0 : index
      %c0_11 = arith.constant 0 : index
      %13 = vector.load %arg4[%c0_10, %c0_11] : memref<128x128xf32, #tpu.memory_space<vmem>>, vector<128x128xf32>
      %c0_12 = arith.constant 0 : index
      %c0_13 = arith.constant 0 : index
      %14 = vector.load %arg7[%c0_12, %c0_13] : memref<128x128xf32, #tpu.memory_space<vmem>>, vector<128x128xf32>
      tpu.vector_store %arg7[%c0_12, %c0_13], %13 {strides = array<i32>} : memref<128x128xf32, #tpu.memory_space<vmem>>, vector<128x128xf32>,
    } else {
    }
    %c0 = arith.constant 0 : index
    %c0_1 = arith.constant 0 : index
    %3 = vector.load %arg7[%c0, %c0_1] : memref<128x128xf32, #tpu.memory_space<vmem>>, vector<128x128xf32>
    %c0_2 = arith.constant 0 : index
    %c0_3 = arith.constant 0 : index
    %4 = vector.load %arg2[%c0_2, %c0_3] : memref<128x128xbf16, #tpu.memory_space<vmem>>, vector<128x128xbf16>
    %5 = arith.extf %4 : vector<128x128xbf16> to vector<128x128xf32>
    %c0_4 = arith.constant 0 : index
    %c0_5 = arith.constant 0 : index
    %6 = vector.load %arg3[%c0_4, %c0_5] : memref<128x128xf32, #tpu.memory_space<vmem>>, vector<128x128xf32>
    %cst = arith.constant dense<0.000000e+00> : vector<128x128xf32>
    %7 = tpu.matmul %5, %6, %cst {dimension_numbers = #tpu.dot_dimension_numbers<[1], [0], [0], [1], [0, 0, 1, 1], [], []>} : vector<128x128xf32>, vector<128x128xf32>, vector<128x128xf32> -> vector<128x128xf32>
    %8 = arith.addf %3, %7 : vector<128x128xf32>
    %c0_6 = arith.constant 0 : index
    %c0_7 = arith.constant 0 : index
    %9 = vector.load %arg7[%c0_6, %c0_7] : memref<128x128xf32, #tpu.memory_space<vmem>>, vector<128x128xf32>
    tpu.vector_store %arg7[%c0_6, %c0_7], %8 {strides = array<i32>} : memref<128x128xf32, #tpu.memory_space<vmem>>, vector<128x128xf32>,
    %c0_i32_8 = arith.constant 0 : i32
    %10 = arith.cmpi eq, %arg1, %c0_i32_8 : i32
    %11 = arith.extui %10 : i1 to i32
    %c0_i32_9 = arith.constant 0 : i32
    %12 = arith.cmpi ne, %11, %c0_i32_9 : i32
    scf.if %12 {
      %c0_10 = arith.constant 0 : index
      %c0_11 = arith.constant 0 : index
      %13 = vector.load %arg5[%c0_10, %c0_11] : memref<128x1xf32, #tpu.memory_space<vmem>>, vector<128x1xf32>
      %c0_12 = arith.constant 0 : index
      %c0_13 = arith.constant 0 : index
      %14 = vector.load %arg7[%c0_12, %c0_13] : memref<128x128xf32, #tpu.memory_space<vmem>>, vector<128x128xf32>
      %15 = vector.broadcast %13 : vector<128x1xf32> to vector<128x128xf32>
      %16 = arith.mulf %15, %14 : vector<128x128xf32>
      %cst_14 = arith.constant 0.000000e+00 : f32
      %17 = vector.broadcast %cst_14 : f32 to vector<128x128xf32>
      %18 = arith.maximumf %16, %17 : vector<128x128xf32>
      %c0_15 = arith.constant 0 : index
      %c0_16 = arith.constant 0 : index
      %19 = vector.load %arg6[%c0_15, %c0_16] : memref<128x128xf32, #tpu.memory_space<vmem>>, vector<128x128xf32>
      tpu.vector_store %arg6[%c0_15, %c0_16], %18 {strides = array<i32>} : memref<128x128xf32, #tpu.memory_space<vmem>>, vector<128x128xf32>,
    } else {
    }
    return
  }
  func.func @transform_0(%arg0: i32, %arg1: i32) -> (i32, i32) {
    %c0_i32 = arith.constant 0 : i32
    return %arg0, %arg1 : i32, i32
  }
  func.func @transform_1(%arg0: i32, %arg1: i32) -> (i32, i32) {
    %c0_i32 = arith.constant 0 : i32
    %c0_i32_0 = arith.constant 0 : i32
    return %arg1, %c0_i32 : i32, i32
  }
  func.func @transform_2(%arg0: i32, %arg1: i32) -> (i32, i32) {
    %c0_i32 = arith.constant 0 : i32
    %c0_i32_0 = arith.constant 0 : i32
    return %arg0, %c0_i32 : i32, i32
  }
  func.func @transform_3(%arg0: i32, %arg1: i32) -> (i32, i32) {
    %c0_i32 = arith.constant 0 : i32
    %c0_i32_0 = arith.constant 0 : i32
    return %arg0, %c0_i32 : i32, i32
  }
  func.func @transform_4(%arg0: i32, %arg1: i32) -> (i32, i32) {
    %c0_i32 = arith.constant 0 : i32
    %c0_i32_0 = arith.constant 0 : i32
    return %arg0, %c0_i32 : i32, i32
  }
}

module attributes {stable_mosaic.version = 11 : i64} {
  func.func @_spmm_kernel(%arg0: i32, %arg1: i32, %arg2: memref<128x128xbf16, #tpu.memory_space<vmem>>, %arg3: memref<128x128xf32, #tpu.memory_space<vmem>>, %arg4: memref<128x128xf32, #tpu.memory_space<vmem>>, %arg5: memref<128x1xf32, #tpu.memory_space<vmem>>, %arg6: memref<128x128xf32, #tpu.memory_space<vmem>>, %arg7: memref<128x128xf32, #tpu.memory_space<vmem>>) attributes {dimension_semantics = [#tpu.dimension_semantics<parallel>, #tpu.dimension_semantics<arbitrary>], iteration_bounds = array<i64: 1, 1>, scalar_prefetch = 0 : i64, scratch_operands = 1 : i64, tpu.core_type = #tpu.core_type<tc>, window_params = [{transform_indices = @transform_0, window_bounds = array<i64: 128, 128>}, {transform_indices = @transform_1, window_bounds = array<i64: 128, 128>}, {transform_indices = @transform_2, window_bounds = array<i64: 128, 128>}, {transform_indices = @transform_3, window_bounds = array<i64: 128, 1>}, {transform_indices = @transform_4, window_bounds = array<i64: 128, 128>}]} {
    %c0_i32 = arith.constant 0 : i32
    %0 = arith.cmpi eq, %arg1, %c0_i32 : i32
    %1 = arith.extui %0 : i1 to i32
    %c0_i32_0 = arith.constant 0 : i32
    %2 = arith.cmpi ne, %1, %c0_i32_0 : i32
    scf.if %2 {
      %c0_10 = arith.constant 0 : index
      %c0_11 = arith.constant 0 : index
      %13 = vector.load %arg4[%c0_10, %c0_11] : memref<128x128xf32, #tpu.memory_space<vmem>>, vector<128x128xf32>
      %c0_12 = arith.constant 0 : index
      %c0_13 = arith.constant 0 : index
      %14 = vector.load %arg7[%c0_12, %c0_13] : memref<128x128xf32, #tpu.memory_space<vmem>>, vector<128x128xf32>
      tpu.vector_store %arg7[%c0_12, %c0_13], %13 {strides = array<i32>} : memref<128x128xf32, #tpu.memory_space<vmem>>, vector<128x128xf32>,
    } else {
    }
    %c0 = arith.constant 0 : index
    %c0_1 = arith.constant 0 : index
    %3 = vector.load %arg7[%c0, %c0_1] : memref<128x128xf32, #tpu.memory_space<vmem>>, vector<128x128xf32>
    %c0_2 = arith.constant 0 : index
    %c0_3 = arith.constant 0 : index
    %4 = vector.load %arg2[%c0_2, %c0_3] : memref<128x128xbf16, #tpu.memory_space<vmem>>, vector<128x128xbf16>
    %5 = arith.extf %4 : vector<128x128xbf16> to vector<128x128xf32>
    %c0_4 = arith.constant 0 : index
    %c0_5 = arith.constant 0 : index
    %6 = vector.load %arg3[%c0_4, %c0_5] : memref<128x128xf32, #tpu.memory_space<vmem>>, vector<128x128xf32>
    %cst = arith.constant dense<0.000000e+00> : vector<128x128xf32>
    %7 = tpu.matmul %5, %6, %cst {dimension_numbers = #tpu.dot_dimension_numbers<[1], [0], [0], [1], [0, 0, 1, 1], [], []>} : vector<128x128xf32>, vector<128x128xf32>, vector<128x128xf32> -> vector<128x128xf32>
    %8 = arith.addf %3, %7 : vector<128x128xf32>
    %c0_6 = arith.constant 0 : index
    %c0_7 = arith.constant 0 : index
    %9 = vector.load %arg7[%c0_6, %c0_7] : memref<128x128xf32, #tpu.memory_space<vmem>>, vector<128x128xf32>
    tpu.vector_store %arg7[%c0_6, %c0_7], %8 {strides = array<i32>} : memref<128x128xf32, #tpu.memory_space<vmem>>, vector<128x128xf32>,
    %c0_i32_8 = arith.constant 0 : i32
    %10 = arith.cmpi eq, %arg1, %c0_i32_8 : i32
    %11 = arith.extui %10 : i1 to i32
    %c0_i32_9 = arith.constant 0 : i32
    %12 = arith.cmpi ne, %11, %c0_i32_9 : i32
    scf.if %12 {
      %c0_10 = arith.constant 0 : index
      %c0_11 = arith.constant 0 : index
      %13 = vector.load %arg5[%c0_10, %c0_11] : memref<128x1xf32, #tpu.memory_space<vmem>>, vector<128x1xf32>
      %c0_12 = arith.constant 0 : index
      %c0_13 = arith.constant 0 : index
      %14 = vector.load %arg7[%c0_12, %c0_13] : memref<128x128xf32, #tpu.memory_space<vmem>>, vector<128x128xf32>
      %15 = vector.broadcast %13 : vector<128x1xf32> to vector<128x128xf32>
      %16 = arith.mulf %15, %14 : vector<128x128xf32>
      %c0_14 = arith.constant 0 : index
      %c0_15 = arith.constant 0 : index
      %17 = vector.load %arg6[%c0_14, %c0_15] : memref<128x128xf32, #tpu.memory_space<vmem>>, vector<128x128xf32>
      tpu.vector_store %arg6[%c0_14, %c0_15], %16 {strides = array<i32>} : memref<128x128xf32, #tpu.memory_space<vmem>>, vector<128x128xf32>,
    } else {
    }
    return
  }
  func.func @transform_0(%arg0: i32, %arg1: i32) -> (i32, i32) {
    %c0_i32 = arith.constant 0 : i32
    return %arg0, %arg1 : i32, i32
  }
  func.func @transform_1(%arg0: i32, %arg1: i32) -> (i32, i32) {
    %c0_i32 = arith.constant 0 : i32
    %c0_i32_0 = arith.constant 0 : i32
    return %arg1, %c0_i32 : i32, i32
  }
  func.func @transform_2(%arg0: i32, %arg1: i32) -> (i32, i32) {
    %c0_i32 = arith.constant 0 : i32
    %c0_i32_0 = arith.constant 0 : i32
    return %arg0, %c0_i32 : i32, i32
  }
  func.func @transform_3(%arg0: i32, %arg1: i32) -> (i32, i32) {
    %c0_i32 = arith.constant 0 : i32
    %c0_i32_0 = arith.constant 0 : i32
    return %arg0, %c0_i32 : i32, i32
  }
  func.func @transform_4(%arg0: i32, %arg1: i32) -> (i32, i32) {
    %c0_i32 = arith.constant 0 : i32
    %c0_i32_0 = arith.constant 0 : i32
    return %arg0, %c0_i32 : i32, i32
  }
}

module attributes {stable_mosaic.version = 11 : i64} {
  func.func @_decoder_kernel(%arg0: i32, %arg1: i32, %arg2: memref<128x128xf32, #tpu.memory_space<vmem>>, %arg3: memref<128x128xf32, #tpu.memory_space<vmem>>, %arg4: memref<128x128xf32, #tpu.memory_space<vmem>>) attributes {dimension_semantics = [#tpu.dimension_semantics<parallel>, #tpu.dimension_semantics<parallel>], iteration_bounds = array<i64: 1, 1>, scalar_prefetch = 0 : i64, scratch_operands = 0 : i64, tpu.core_type = #tpu.core_type<tc>, window_params = [{transform_indices = @transform_0, window_bounds = array<i64: 128, 128>}, {transform_indices = @transform_1, window_bounds = array<i64: 128, 128>}, {transform_indices = @transform_2, window_bounds = array<i64: 128, 128>}]} {
    %c0 = arith.constant 0 : index
    %c0_0 = arith.constant 0 : index
    %0 = vector.load %arg2[%c0, %c0_0] : memref<128x128xf32, #tpu.memory_space<vmem>>, vector<128x128xf32>
    %c0_1 = arith.constant 0 : index
    %c0_2 = arith.constant 0 : index
    %1 = vector.load %arg3[%c0_1, %c0_2] : memref<128x128xf32, #tpu.memory_space<vmem>>, vector<128x128xf32>
    %cst = arith.constant dense<0.000000e+00> : vector<128x128xf32>
    %2 = tpu.matmul %0, %1, %cst {dimension_numbers = #tpu.dot_dimension_numbers<[1], [1], [0], [0], [0, 0, 1, 0], [], []>} : vector<128x128xf32>, vector<128x128xf32>, vector<128x128xf32> -> vector<128x128xf32>
    %cst_3 = arith.constant 5.000000e-01 : f32
    %3 = vector.broadcast %cst_3 : f32 to vector<128x128xf32>
    %4 = arith.mulf %3, %2 : vector<128x128xf32>
    %5 = math.tanh %4 : vector<128x128xf32>
    %cst_4 = arith.constant 5.000000e-01 : f32
    %6 = vector.broadcast %cst_4 : f32 to vector<128x128xf32>
    %7 = arith.mulf %6, %5 : vector<128x128xf32>
    %cst_5 = arith.constant 5.000000e-01 : f32
    %8 = vector.broadcast %cst_5 : f32 to vector<128x128xf32>
    %9 = arith.addf %7, %8 : vector<128x128xf32>
    %c0_6 = arith.constant 0 : index
    %c0_7 = arith.constant 0 : index
    %10 = vector.load %arg4[%c0_6, %c0_7] : memref<128x128xf32, #tpu.memory_space<vmem>>, vector<128x128xf32>
    tpu.vector_store %arg4[%c0_6, %c0_7], %9 {strides = array<i32>} : memref<128x128xf32, #tpu.memory_space<vmem>>, vector<128x128xf32>,
    return
  }
  func.func @transform_0(%arg0: i32, %arg1: i32) -> (i32, i32) {
    %c0_i32 = arith.constant 0 : i32
    %c0_i32_0 = arith.constant 0 : i32
    return %arg0, %c0_i32 : i32, i32
  }
  func.func @transform_1(%arg0: i32, %arg1: i32) -> (i32, i32) {
    %c0_i32 = arith.constant 0 : i32
    %c0_i32_0 = arith.constant 0 : i32
    return %arg1, %c0_i32 : i32, i32
  }
  func.func @transform_2(%arg0: i32, %arg1: i32) -> (i32, i32) {
    %c0_i32 = arith.constant 0 : i32
    return %arg0, %arg1 : i32, i32
  }
}

</mosaic_0001>

<llo_original>
// kernel: gncae_forward.9
$region0: #{gncae_forward.9}
  #allocation0 [shape = 'u32[]', space=smem, size = 0x4, offset = 0x4, fixed_abs, tag = 'smem constant byte address 0x4 - core index']
  #allocation1 [shape = 'u32[144,128]{1,0:T(1,128)}', space=vmem, size = 0x12000, scoped, tag = 'internal scratch']
  %s0 = inlined_call_operand.vmem [shape: f32[128,128], index: 0, kind: input, shape index: {}, may-alias: {0,1}]
  %s1 = inlined_call_operand.vmem [shape: f32[128,128], index: 1, kind: input, shape index: {}, may-alias: {0,1}]
  %s2 = inlined_call_operand.vmem [shape: f32[128,128], index: 2, kind: output, shape index: {}]
  %s3 = sld [smem:[#allocation0]]
  $region18: #{gncae_forward.9} parent=0
    _
  %s5 = ssub.s32 1, %s3
  %s6 = scalar_select 0, %s5, %s3
  // Predicated region
  $region2: #{gncae_forward.9} parent=0 // pred_check
    _
  $region3: #{gncae_forward.9} parent=0 // pred_check_branch
    %8 = sbr.rel (0) target = $region5
  $region4: #{gncae_forward.9} parent=0 // pred_region
    _
  $region5: #{gncae_forward.9} parent=0 // pred_fallthru
    _
  // Predicated region
  $region6: #{gncae_forward.9} parent=0 // pred_check
    _
  $region7: #{gncae_forward.9} parent=0 // pred_check_branch
    %10 = sbr.rel (0) target = $region9
  $region8: #{gncae_forward.9} parent=0 // pred_region
    _
  $region9: #{gncae_forward.9} parent=0 // pred_fallthru
    _
  %v11 = vld [vmem:[%s0] sm:$0xff]
  %v12 = vld [vmem:[%s0 + $0x8] sm:$0xff]
  %v13 = vld [vmem:[%s0 + $0x10] sm:$0xff]
  %v14 = vld [vmem:[%s0 + $0x18] sm:$0xff]
  %v15 = vld [vmem:[%s0 + $0x20] sm:$0xff]
  %v16 = vld [vmem:[%s0 + $0x28] sm:$0xff]
  %v17 = vld [vmem:[%s0 + $0x30] sm:$0xff]
  %v18 = vld [vmem:[%s0 + $0x38] sm:$0xff]
  %v19 = vld [vmem:[%s0 + $0x40] sm:$0xff]
  %v20 = vld [vmem:[%s0 + $0x48] sm:$0xff]
  %v21 = vld [vmem:[%s0 + $0x50] sm:$0xff]
  %v22 = vld [vmem:[%s0 + $0x58] sm:$0xff]
  %v23 = vld [vmem:[%s0 + $0x60] sm:$0xff]
  %v24 = vld [vmem:[%s0 + $0x68] sm:$0xff]
  %v25 = vld [vmem:[%s0 + $0x70] sm:$0xff]
  %v26 = vld [vmem:[%s0 + $0x78] sm:$0xff]
  %v27 = vld [vmem:[%s1] sm:$0xff]
  %v28 = vld [vmem:[%s1 + $0x8] sm:$0xff]
  %v29 = vld [vmem:[%s1 + $0x10] sm:$0xff]
  %v30 = vld [vmem:[%s1 + $0x18] sm:$0xff]
  %v31 = vld [vmem:[%s1 + $0x20] sm:$0xff]
  %v32 = vld [vmem:[%s1 + $0x28] sm:$0xff]
  %v33 = vld [vmem:[%s1 + $0x30] sm:$0xff]
  %v34 = vld [vmem:[%s1 + $0x38] sm:$0xff]
  %v35 = vld [vmem:[%s1 + $0x40] sm:$0xff]
  %v36 = vld [vmem:[%s1 + $0x48] sm:$0xff]
  %v37 = vld [vmem:[%s1 + $0x50] sm:$0xff]
  %v38 = vld [vmem:[%s1 + $0x58] sm:$0xff]
  %v39 = vld [vmem:[%s1 + $0x60] sm:$0xff]
  %v40 = vld [vmem:[%s1 + $0x68] sm:$0xff]
  %v41 = vld [vmem:[%s1 + $0x70] sm:$0xff]
  %v42 = vld [vmem:[%s1 + $0x78] sm:$0xff]
  %43 = vmatprep.subr.mxu0 0.0
  %44 = vmatpush1.xpose.msra.mxu0 %v27
  %45 = vmatprep.subr.mxu0 0.0
  %46 = vmatpush1.xpose.msra.mxu0 %v28
  %47 = vmatprep.subr.mxu0 0.0
  %48 = vmatpush1.xpose.msra.mxu0 %v29
  %49 = vmatprep.subr.mxu0 0.0
  %50 = vmatpush1.xpose.msra.mxu0 %v30
  %51 = vmatprep.subr.mxu0 0.0
  %52 = vmatpush1.xpose.msra.mxu0 %v31
  %53 = vmatprep.subr.mxu0 0.0
  %54 = vmatpush1.xpose.msra.mxu0 %v32
  %55 = vmatprep.subr.mxu0 0.0
  %56 = vmatpush1.xpose.msra.mxu0 %v33
  %57 = vmatprep.subr.mxu0 0.0
  %58 = vmatpush1.xpose.msra.mxu0 %v34
  %59 = vmatprep.subr.mxu0 0.0
  %60 = vmatpush1.xpose.msra.mxu0 %v35
  %61 = vmatprep.subr.mxu0 0.0
  %62 = vmatpush1.xpose.msra.mxu0 %v36
  %63 = vmatprep.subr.mxu0 0.0
  %64 = vmatpush1.xpose.msra.mxu0 %v37
  %65 = vmatprep.subr.mxu0 0.0
  %66 = vmatpush1.xpose.msra.mxu0 %v38
  %67 = vmatprep.subr.mxu0 0.0
  %68 = vmatpush1.xpose.msra.mxu0 %v39
  %69 = vmatprep.subr.mxu0 0.0
  %70 = vmatpush1.xpose.msra.mxu0 %v40
  %71 = vmatprep.subr.mxu0 0.0
  %72 = vmatpush1.xpose.msra.mxu0 %v41
  %73 = vmatprep.subr.mxu0 0.0
  %74 = vmatpush1.xpose.msra.mxu0 %v42
  %75 = vmatprep.subr.mxu0 0.0
  %76 = vmatpush1.xpose.msra.mxu0 0.0
  %77 = vmatprep.subr.mxu0 0.0
  %78 = vmatpush1.xpose.msra.mxu0 0.0
  %79 = vmatprep.subr.mxu0 0.0
  %80 = vmatpush1.xpose.msra.mxu0 0.0
  %81 = vmatprep.subr.mxu0 0.0
  %82 = vmatpush1.xpose.msra.mxu0 0.0
  %83 = vmatprep.subr.mxu0 0.0
  %84 = vmatpush1.xpose.msra.mxu0 0.0
  %85 = vmatprep.subr.mxu0 0.0
  %86 = vmatpush1.xpose.msra.mxu0 0.0
  %87 = vmatprep.subr.mxu0 0.0
  %88 = vmatpush1.xpose.msra.mxu0 0.0
  %89 = vmatprep.subr.mxu0 0.0
  %90 = vmatpush1.xpose.msra.mxu0 0.0
  %91 = vmatprep.subr.mxu0 0.0
  %92 = vmatpush1.xpose.msra.mxu0 0.0
  %93 = vmatprep.subr.mxu0 0.0
  %94 = vmatpush1.xpose.msra.mxu0 0.0
  %95 = vmatprep.subr.mxu0 0.0
  %96 = vmatpush1.xpose.msra.mxu0 0.0
  %97 = vmatprep.subr.mxu0 0.0
  %98 = vmatpush1.xpose.msra.mxu0 0.0
  %99 = vmatprep.subr.mxu0 0.0
  %100 = vmatpush1.xpose.msra.mxu0 0.0
  %101 = vmatprep.subr.mxu0 0.0
  %102 = vmatpush1.xpose.msra.mxu0 0.0
  %103 = vmatprep.subr.mxu0 0.0
  %104 = vmatpush1.xpose.msra.mxu0 0.0
  %105 = vmatprep.subr.mxu0 0.0
  %106 = vmatpush1.xpose.msra.mxu0 0.0
  %107 = vmatprep.mubr.f32.mxu0 0.0
  %108 = vmatmul.mubr.f32.gmra.mrb[0].mxu0 %v11
  %v109 = vpop.f32.mrb[0].mxu0
  %v110 = vadd.f32 0.0, %v109
  %v111 = vpop.f32.mrb[0].mxu0
  %112 = vmatprep.mubr.f32.mxu0 0.0
  %113 = vmatmul.mubr.f32.gmra.mrb[0].mxu0 %v12
  %v114 = vpop.f32.mrb[0].mxu0
  %v115 = vadd.f32 0.0, %v114
  %v116 = vpop.f32.mrb[0].mxu0
  %117 = vmatprep.mubr.f32.mxu0 0.0
  %118 = vmatmul.mubr.f32.gmra.mrb[0].mxu0 %v13
  %v119 = vpop.f32.mrb[0].mxu0
  %v120 = vadd.f32 0.0, %v119
  %v121 = vpop.f32.mrb[0].mxu0
  %122 = vmatprep.mubr.f32.mxu0 0.0
  %123 = vmatmul.mubr.f32.gmra.mrb[0].mxu0 %v14
  %v124 = vpop.f32.mrb[0].mxu0
  %v125 = vadd.f32 0.0, %v124
  %v126 = vpop.f32.mrb[0].mxu0
  %127 = vmatprep.mubr.f32.mxu0 0.0
  %128 = vmatmul.mubr.f32.gmra.mrb[0].mxu0 %v15
  %v129 = vpop.f32.mrb[0].mxu0
  %v130 = vadd.f32 0.0, %v129
  %v131 = vpop.f32.mrb[0].mxu0
  %132 = vmatprep.mubr.f32.mxu0 0.0
  %133 = vmatmul.mubr.f32.gmra.mrb[0].mxu0 %v16
  %v134 = vpop.f32.mrb[0].mxu0
  %v135 = vadd.f32 0.0, %v134
  %v136 = vpop.f32.mrb[0].mxu0
  %137 = vmatprep.mubr.f32.mxu0 0.0
  %138 = vmatmul.mubr.f32.gmra.mrb[0].mxu0 %v17
  %v139 = vpop.f32.mrb[0].mxu0
  %v140 = vadd.f32 0.0, %v139
  %v141 = vpop.f32.mrb[0].mxu0
  %142 = vmatprep.mubr.f32.mxu0 0.0
  %143 = vmatmul.mubr.f32.gmra.mrb[0].mxu0 %v18
  %v144 = vpop.f32.mrb[0].mxu0
  %v145 = vadd.f32 0.0, %v144
  %v146 = vpop.f32.mrb[0].mxu0
  %147 = vmatprep.mubr.f32.mxu0 0.0
  %148 = vmatmul.mubr.f32.gmra.mrb[0].mxu0 %v19
  %v149 = vpop.f32.mrb[0].mxu0
  %v150 = vadd.f32 0.0, %v149
  %v151 = vpop.f32.mrb[0].mxu0
  %152 = vmatprep.mubr.f32.mxu0 0.0
  %153 = vmatmul.mubr.f32.gmra.mrb[0].mxu0 %v20
  %v154 = vpop.f32.mrb[0].mxu0
  %v155 = vadd.f32 0.0, %v154
  %v156 = vpop.f32.mrb[0].mxu0
  %157 = vmatprep.mubr.f32.mxu0 0.0
  %158 = vmatmul.mubr.f32.gmra.mrb[0].mxu0 %v21
  %v159 = vpop.f32.mrb[0].mxu0
  %v160 = vadd.f32 0.0, %v159
  %v161 = vpop.f32.mrb[0].mxu0
  %162 = vmatprep.mubr.f32.mxu0 0.0
  %163 = vmatmul.mubr.f32.gmra.mrb[0].mxu0 %v22
  %v164 = vpop.f32.mrb[0].mxu0
  %v165 = vadd.f32 0.0, %v164
  %v166 = vpop.f32.mrb[0].mxu0
  %167 = vmatprep.mubr.f32.mxu0 0.0
  %168 = vmatmul.mubr.f32.gmra.mrb[0].mxu0 %v23
  %v169 = vpop.f32.mrb[0].mxu0
  %v170 = vadd.f32 0.0, %v169
  %v171 = vpop.f32.mrb[0].mxu0
  %172 = vmatprep.mubr.f32.mxu0 0.0
  %173 = vmatmul.mubr.f32.gmra.mrb[0].mxu0 %v24
  %v174 = vpop.f32.mrb[0].mxu0
  %v175 = vadd.f32 0.0, %v174
  %v176 = vpop.f32.mrb[0].mxu0
  %177 = vmatprep.mubr.f32.mxu0 0.0
  %178 = vmatmul.mubr.f32.gmra.mrb[0].mxu0 %v25
  %v179 = vpop.f32.mrb[0].mxu0
  %v180 = vadd.f32 0.0, %v179
  %v181 = vpop.f32.mrb[0].mxu0
  %182 = vmatprep.mubr.f32.mxu0 0.0
  %183 = vmatmul.mubr.f32.gmra.mrb[0].mxu0 %v26
  %v184 = vpop.f32.mrb[0].mxu0
  %v185 = vadd.f32 0.0, %v184
  %v186 = vpop.f32.mrb[0].mxu0
  %187 = vdwg.mxu0
  %v188 = vmul.f32 %v110, 0.5
  %v189 = vmul.f32 %v115, 0.5
  %v190 = vmul.f32 %v120, 0.5
  %v191 = vmul.f32 %v125, 0.5
  %v192 = vmul.f32 %v130, 0.5
  %v193 = vmul.f32 %v135, 0.5
  %v194 = vmul.f32 %v140, 0.5
  %v195 = vmul.f32 %v145, 0.5
  %v196 = vmul.f32 %v150, 0.5
  %v197 = vmul.f32 %v155, 0.5
  %v198 = vmul.f32 %v160, 0.5
  %v199 = vmul.f32 %v165, 0.5
  %v200 = vmul.f32 %v170, 0.5
  %v201 = vmul.f32 %v175, 0.5
  %v202 = vmul.f32 %v180, 0.5
  %v203 = vmul.f32 %v185, 0.5
  %v204 = vtanh.pop %v188
  %v205 = vtanh.pop %v189
  %v206 = vtanh.pop %v190
  %v207 = vtanh.pop %v191
  %v208 = vtanh.pop %v192
  %v209 = vtanh.pop %v193
  %v210 = vtanh.pop %v194
  %v211 = vtanh.pop %v195
  %v212 = vtanh.pop %v196
  %v213 = vtanh.pop %v197
  %v214 = vtanh.pop %v198
  %v215 = vtanh.pop %v199
  %v216 = vtanh.pop %v200
  %v217 = vtanh.pop %v201
  %v218 = vtanh.pop %v202
  %v219 = vtanh.pop %v203
  %v220 = vmul.f32 %v204, 0.5
  %v221 = vmul.f32 %v205, 0.5
  %v222 = vmul.f32 %v206, 0.5
  %v223 = vmul.f32 %v207, 0.5
  %v224 = vmul.f32 %v208, 0.5
  %v225 = vmul.f32 %v209, 0.5
  %v226 = vmul.f32 %v210, 0.5
  %v227 = vmul.f32 %v211, 0.5
  %v228 = vmul.f32 %v212, 0.5
  %v229 = vmul.f32 %v213, 0.5
  %v230 = vmul.f32 %v214, 0.5
  %v231 = vmul.f32 %v215, 0.5
  %v232 = vmul.f32 %v216, 0.5
  %v233 = vmul.f32 %v217, 0.5
  %v234 = vmul.f32 %v218, 0.5
  %v235 = vmul.f32 %v219, 0.5
  %v236 = vadd.f32 %v220, 0.5
  %v237 = vadd.f32 %v221, 0.5
  %v238 = vadd.f32 %v222, 0.5
  %v239 = vadd.f32 %v223, 0.5
  %v240 = vadd.f32 %v224, 0.5
  %v241 = vadd.f32 %v225, 0.5
  %v242 = vadd.f32 %v226, 0.5
  %v243 = vadd.f32 %v227, 0.5
  %v244 = vadd.f32 %v228, 0.5
  %v245 = vadd.f32 %v229, 0.5
  %v246 = vadd.f32 %v230, 0.5
  %v247 = vadd.f32 %v231, 0.5
  %v248 = vadd.f32 %v232, 0.5
  %v249 = vadd.f32 %v233, 0.5
  %v250 = vadd.f32 %v234, 0.5
  %v251 = vadd.f32 %v235, 0.5
  %252 = vst [vmem:[%s2] sm:$0xff] %v236
  %253 = vst [vmem:[%s2 + $0x8] sm:$0xff] %v237
  %254 = vst [vmem:[%s2 + $0x10] sm:$0xff] %v238
  %255 = vst [vmem:[%s2 + $0x18] sm:$0xff] %v239
  %256 = vst [vmem:[%s2 + $0x20] sm:$0xff] %v240
  %257 = vst [vmem:[%s2 + $0x28] sm:$0xff] %v241
  %258 = vst [vmem:[%s2 + $0x30] sm:$0xff] %v242
  %259 = vst [vmem:[%s2 + $0x38] sm:$0xff] %v243
  %260 = vst [vmem:[%s2 + $0x40] sm:$0xff] %v244
  %261 = vst [vmem:[%s2 + $0x48] sm:$0xff] %v245
  %262 = vst [vmem:[%s2 + $0x50] sm:$0xff] %v246
  %263 = vst [vmem:[%s2 + $0x58] sm:$0xff] %v247
  %264 = vst [vmem:[%s2 + $0x60] sm:$0xff] %v248
  %265 = vst [vmem:[%s2 + $0x68] sm:$0xff] %v249
  %266 = vst [vmem:[%s2 + $0x70] sm:$0xff] %v250
  %267 = vst [vmem:[%s2 + $0x78] sm:$0xff] %v251
  // Predicated region
  $region10: #{gncae_forward.9} parent=0 // pred_check
    _
  $region11: #{gncae_forward.9} parent=0 // pred_check_branch
    %269 = sbr.rel (0) target = $region13
  $region12: #{gncae_forward.9} parent=0 // pred_region
    _
  $region13: #{gncae_forward.9} parent=0 // pred_fallthru
    _
  // Predicated region
  $region14: #{gncae_forward.9} parent=0 // pred_check
    _
  $region15: #{gncae_forward.9} parent=0 // pred_check_branch
    %271 = sbr.rel (0) target = $region17
  $region16: #{gncae_forward.9} parent=0 // pred_region
    _
  $region17: #{gncae_forward.9} parent=0 // pred_fallthru
    _

// kernel: gncae_forward.5
$region0: #{gncae_forward.5}
  #allocation0 [shape = 'u32[]', space=smem, size = 0x4, offset = 0x4, fixed_abs, tag = 'smem constant byte address 0x4 - core index']
  #allocation1 [shape = 'u32[144,128]{1,0:T(1,128)}', space=vmem, size = 0x12000, scoped, tag = 'internal scratch']
  %s0 = inlined_call_operand.vmem [shape: f32[128,128], index: 0, kind: input, shape index: {}]
  %s1 = inlined_call_operand.vmem [shape: f32[128,128], index: 1, kind: input, shape index: {}]
  %s2 = inlined_call_operand.vmem [shape: f32[128,1], index: 2, kind: input, shape index: {}]
  %s3 = inlined_call_operand.vmem [shape: f32[128,128], index: 3, kind: output, shape index: {}]
  %s4 = sld [smem:[#allocation0]]
  $region22: #{gncae_forward.5} parent=0
    _
  %s6 = ssub.s32 1, %s4
  %s7 = scalar_select 0, %s6, %s4
  // Predicated region
  $region2: #{gncae_forward.5} parent=0 // pred_check
    _
  $region3: #{gncae_forward.5} parent=0 // pred_check_branch
    %9 = sbr.rel (0) target = $region5
  $region4: #{gncae_forward.5} parent=0 // pred_region
    _
  $region5: #{gncae_forward.5} parent=0 // pred_fallthru
    _
  // Predicated region
  $region6: #{gncae_forward.5} parent=0 // pred_check
    _
  $region7: #{gncae_forward.5} parent=0 // pred_check_branch
    %11 = sbr.rel (0) target = $region9
  $region8: #{gncae_forward.5} parent=0 // pred_region
    _
  $region9: #{gncae_forward.5} parent=0 // pred_fallthru
    _
  // Predicated region
  $region10: #{gncae_forward.5} parent=0 // pred_check
    _
  $region11: #{gncae_forward.5} parent=0 // pred_check_branch
    %13 = sbr.rel (0) target = $region13
  $region12: #{gncae_forward.5} parent=0 // pred_region
    _
  $region13: #{gncae_forward.5} parent=0 // pred_fallthru
    _
  %v14 = vld [vmem:[%s0] sm:$0xff]
  %v15 = vld [vmem:[%s0 + $0x8] sm:$0xff]
  %v16 = vld [vmem:[%s0 + $0x10] sm:$0xff]
  %v17 = vld [vmem:[%s0 + $0x18] sm:$0xff]
  %v18 = vld [vmem:[%s0 + $0x20] sm:$0xff]
  %v19 = vld [vmem:[%s0 + $0x28] sm:$0xff]
  %v20 = vld [vmem:[%s0 + $0x30] sm:$0xff]
  %v21 = vld [vmem:[%s0 + $0x38] sm:$0xff]
  %v22 = vld [vmem:[%s0 + $0x40] sm:$0xff]
  %v23 = vld [vmem:[%s0 + $0x48] sm:$0xff]
  %v24 = vld [vmem:[%s0 + $0x50] sm:$0xff]
  %v25 = vld [vmem:[%s0 + $0x58] sm:$0xff]
  %v26 = vld [vmem:[%s0 + $0x60] sm:$0xff]
  %v27 = vld [vmem:[%s0 + $0x68] sm:$0xff]
  %v28 = vld [vmem:[%s0 + $0x70] sm:$0xff]
  %v29 = vld [vmem:[%s0 + $0x78] sm:$0xff]
  %v30 = vld [vmem:[%s1] sm:$0xff]
  %v31 = vld [vmem:[%s1 + $0x8] sm:$0xff]
  %v32 = vld [vmem:[%s1 + $0x10] sm:$0xff]
  %v33 = vld [vmem:[%s1 + $0x18] sm:$0xff]
  %v34 = vld [vmem:[%s1 + $0x20] sm:$0xff]
  %v35 = vld [vmem:[%s1 + $0x28] sm:$0xff]
  %v36 = vld [vmem:[%s1 + $0x30] sm:$0xff]
  %v37 = vld [vmem:[%s1 + $0x38] sm:$0xff]
  %v38 = vld [vmem:[%s1 + $0x40] sm:$0xff]
  %v39 = vld [vmem:[%s1 + $0x48] sm:$0xff]
  %v40 = vld [vmem:[%s1 + $0x50] sm:$0xff]
  %v41 = vld [vmem:[%s1 + $0x58] sm:$0xff]
  %v42 = vld [vmem:[%s1 + $0x60] sm:$0xff]
  %v43 = vld [vmem:[%s1 + $0x68] sm:$0xff]
  %v44 = vld [vmem:[%s1 + $0x70] sm:$0xff]
  %v45 = vld [vmem:[%s1 + $0x78] sm:$0xff]
  %46 = vmatprep.subr.mxu0 0.0
  %47 = vmatpush1.msra.mxu0 %v30
  %48 = vmatprep.subr.mxu0 0.0
  %49 = vmatpush1.msra.mxu0 %v31
  %50 = vmatprep.subr.mxu0 0.0
  %51 = vmatpush1.msra.mxu0 %v32
  %52 = vmatprep.subr.mxu0 0.0
  %53 = vmatpush1.msra.mxu0 %v33
  %54 = vmatprep.subr.mxu0 0.0
  %55 = vmatpush1.msra.mxu0 %v34
  %56 = vmatprep.subr.mxu0 0.0
  %57 = vmatpush1.msra.mxu0 %v35
  %58 = vmatprep.subr.mxu0 0.0
  %59 = vmatpush1.msra.mxu0 %v36
  %60 = vmatprep.subr.mxu0 0.0
  %61 = vmatpush1.msra.mxu0 %v37
  %62 = vmatprep.subr.mxu0 0.0
  %63 = vmatpush1.msra.mxu0 %v38
  %64 = vmatprep.subr.mxu0 0.0
  %65 = vmatpush1.msra.mxu0 %v39
  %66 = vmatprep.subr.mxu0 0.0
  %67 = vmatpush1.msra.mxu0 %v40
  %68 = vmatprep.subr.mxu0 0.0
  %69 = vmatpush1.msra.mxu0 %v41
  %70 = vmatprep.subr.mxu0 0.0
  %71 = vmatpush1.msra.mxu0 %v42
  %72 = vmatprep.subr.mxu0 0.0
  %73 = vmatpush1.msra.mxu0 %v43
  %74 = vmatprep.subr.mxu0 0.0
  %75 = vmatpush1.msra.mxu0 %v44
  %76 = vmatprep.subr.mxu0 0.0
  %77 = vmatpush1.msra.mxu0 %v45
  %78 = vmatprep.subr.mxu0 0.0
  %79 = vmatpush1.msra.mxu0 0.0
  %80 = vmatprep.subr.mxu0 0.0
  %81 = vmatpush1.msra.mxu0 0.0
  %82 = vmatprep.subr.mxu0 0.0
  %83 = vmatpush1.msra.mxu0 0.0
  %84 = vmatprep.subr.mxu0 0.0
  %85 = vmatpush1.msra.mxu0 0.0
  %86 = vmatprep.subr.mxu0 0.0
  %87 = vmatpush1.msra.mxu0 0.0
  %88 = vmatprep.subr.mxu0 0.0
  %89 = vmatpush1.msra.mxu0 0.0
  %90 = vmatprep.subr.mxu0 0.0
  %91 = vmatpush1.msra.mxu0 0.0
  %92 = vmatprep.subr.mxu0 0.0
  %93 = vmatpush1.msra.mxu0 0.0
  %94 = vmatprep.subr.mxu0 0.0
  %95 = vmatpush1.msra.mxu0 0.0
  %96 = vmatprep.subr.mxu0 0.0
  %97 = vmatpush1.msra.mxu0 0.0
  %98 = vmatprep.subr.mxu0 0.0
  %99 = vmatpush1.msra.mxu0 0.0
  %100 = vmatprep.subr.mxu0 0.0
  %101 = vmatpush1.msra.mxu0 0.0
  %102 = vmatprep.subr.mxu0 0.0
  %103 = vmatpush1.msra.mxu0 0.0
  %104 = vmatprep.subr.mxu0 0.0
  %105 = vmatpush1.msra.mxu0 0.0
  %106 = vmatprep.subr.mxu0 0.0
  %107 = vmatpush1.msra.mxu0 0.0
  %108 = vmatprep.subr.mxu0 0.0
  %109 = vmatpush1.msra.mxu0 0.0
  %110 = vmatprep.mubr.f32.mxu0 0.0
  %111 = vmatmul.mubr.f32.gmra.mrb[0].mxu0 %v14
  %v112 = vpop.f32.mrb[0].mxu0
  %v113 = vadd.f32 0.0, %v112
  %v114 = vpop.f32.mrb[0].mxu0
  %115 = vmatprep.mubr.f32.mxu0 0.0
  %116 = vmatmul.mubr.f32.gmra.mrb[0].mxu0 %v15
  %v117 = vpop.f32.mrb[0].mxu0
  %v118 = vadd.f32 0.0, %v117
  %v119 = vpop.f32.mrb[0].mxu0
  %120 = vmatprep.mubr.f32.mxu0 0.0
  %121 = vmatmul.mubr.f32.gmra.mrb[0].mxu0 %v16
  %v122 = vpop.f32.mrb[0].mxu0
  %v123 = vadd.f32 0.0, %v122
  %v124 = vpop.f32.mrb[0].mxu0
  %125 = vmatprep.mubr.f32.mxu0 0.0
  %126 = vmatmul.mubr.f32.gmra.mrb[0].mxu0 %v17
  %v127 = vpop.f32.mrb[0].mxu0
  %v128 = vadd.f32 0.0, %v127
  %v129 = vpop.f32.mrb[0].mxu0
  %130 = vmatprep.mubr.f32.mxu0 0.0
  %131 = vmatmul.mubr.f32.gmra.mrb[0].mxu0 %v18
  %v132 = vpop.f32.mrb[0].mxu0
  %v133 = vadd.f32 0.0, %v132
  %v134 = vpop.f32.mrb[0].mxu0
  %135 = vmatprep.mubr.f32.mxu0 0.0
  %136 = vmatmul.mubr.f32.gmra.mrb[0].mxu0 %v19
  %v137 = vpop.f32.mrb[0].mxu0
  %v138 = vadd.f32 0.0, %v137
  %v139 = vpop.f32.mrb[0].mxu0
  %140 = vmatprep.mubr.f32.mxu0 0.0
  %141 = vmatmul.mubr.f32.gmra.mrb[0].mxu0 %v20
  %v142 = vpop.f32.mrb[0].mxu0
  %v143 = vadd.f32 0.0, %v142
  %v144 = vpop.f32.mrb[0].mxu0
  %145 = vmatprep.mubr.f32.mxu0 0.0
  %146 = vmatmul.mubr.f32.gmra.mrb[0].mxu0 %v21
  %v147 = vpop.f32.mrb[0].mxu0
  %v148 = vadd.f32 0.0, %v147
  %v149 = vpop.f32.mrb[0].mxu0
  %150 = vmatprep.mubr.f32.mxu0 0.0
  %151 = vmatmul.mubr.f32.gmra.mrb[0].mxu0 %v22
  %v152 = vpop.f32.mrb[0].mxu0
  %v153 = vadd.f32 0.0, %v152
  %v154 = vpop.f32.mrb[0].mxu0
  %155 = vmatprep.mubr.f32.mxu0 0.0
  %156 = vmatmul.mubr.f32.gmra.mrb[0].mxu0 %v23
  %v157 = vpop.f32.mrb[0].mxu0
  %v158 = vadd.f32 0.0, %v157
  %v159 = vpop.f32.mrb[0].mxu0
  %160 = vmatprep.mubr.f32.mxu0 0.0
  %161 = vmatmul.mubr.f32.gmra.mrb[0].mxu0 %v24
  %v162 = vpop.f32.mrb[0].mxu0
  %v163 = vadd.f32 0.0, %v162
  %v164 = vpop.f32.mrb[0].mxu0
  %165 = vmatprep.mubr.f32.mxu0 0.0
  %166 = vmatmul.mubr.f32.gmra.mrb[0].mxu0 %v25
  %v167 = vpop.f32.mrb[0].mxu0
  %v168 = vadd.f32 0.0, %v167
  %v169 = vpop.f32.mrb[0].mxu0
  %170 = vmatprep.mubr.f32.mxu0 0.0
  %171 = vmatmul.mubr.f32.gmra.mrb[0].mxu0 %v26
  %v172 = vpop.f32.mrb[0].mxu0
  %v173 = vadd.f32 0.0, %v172
  %v174 = vpop.f32.mrb[0].mxu0
  %175 = vmatprep.mubr.f32.mxu0 0.0
  %176 = vmatmul.mubr.f32.gmra.mrb[0].mxu0 %v27
  %v177 = vpop.f32.mrb[0].mxu0
  %v178 = vadd.f32 0.0, %v177
  %v179 = vpop.f32.mrb[0].mxu0
  %180 = vmatprep.mubr.f32.mxu0 0.0
  %181 = vmatmul.mubr.f32.gmra.mrb[0].mxu0 %v28
  %v182 = vpop.f32.mrb[0].mxu0
  %v183 = vadd.f32 0.0, %v182
  %v184 = vpop.f32.mrb[0].mxu0
  %185 = vmatprep.mubr.f32.mxu0 0.0
  %186 = vmatmul.mubr.f32.gmra.mrb[0].mxu0 %v29
  %v187 = vpop.f32.mrb[0].mxu0
  %v188 = vadd.f32 0.0, %v187
  %v189 = vpop.f32.mrb[0].mxu0
  %190 = vdwg.mxu0
  %v191 = vmul.f32 %v113, %v113
  %v192 = vmul.f32 %v118, %v118
  %v193 = vmul.f32 %v123, %v123
  %v194 = vmul.f32 %v128, %v128
  %v195 = vmul.f32 %v133, %v133
  %v196 = vmul.f32 %v138, %v138
  %v197 = vmul.f32 %v143, %v143
  %v198 = vmul.f32 %v148, %v148
  %v199 = vmul.f32 %v153, %v153
  %v200 = vmul.f32 %v158, %v158
  %v201 = vmul.f32 %v163, %v163
  %v202 = vmul.f32 %v168, %v168
  %v203 = vmul.f32 %v173, %v173
  %v204 = vmul.f32 %v178, %v178
  %v205 = vmul.f32 %v183, %v183
  %v206 = vmul.f32 %v188, %v188
  %207 = vadd.xlane.f32.xlu0 %v191
  %v208 = vpop.xlane.xlu0 %207
  %209 = vadd.xlane.f32.xlu0 %v192
  %v210 = vpop.xlane.xlu0 %209
  %211 = vadd.xlane.f32.xlu0 %v193
  %v212 = vpop.xlane.xlu0 %211
  %213 = vadd.xlane.f32.xlu0 %v194
  %v214 = vpop.xlane.xlu0 %213
  %215 = vadd.xlane.f32.xlu0 %v195
  %v216 = vpop.xlane.xlu0 %215
  %217 = vadd.xlane.f32.xlu0 %v196
  %v218 = vpop.xlane.xlu0 %217
  %219 = vadd.xlane.f32.xlu0 %v197
  %v220 = vpop.xlane.xlu0 %219
  %221 = vadd.xlane.f32.xlu0 %v198
  %v222 = vpop.xlane.xlu0 %221
  %223 = vadd.xlane.f32.xlu0 %v199
  %v224 = vpop.xlane.xlu0 %223
  %225 = vadd.xlane.f32.xlu0 %v200
  %v226 = vpop.xlane.xlu0 %225
  %227 = vadd.xlane.f32.xlu0 %v201
  %v228 = vpop.xlane.xlu0 %227
  %229 = vadd.xlane.f32.xlu0 %v202
  %v230 = vpop.xlane.xlu0 %229
  %231 = vadd.xlane.f32.xlu0 %v203
  %v232 = vpop.xlane.xlu0 %231
  %233 = vadd.xlane.f32.xlu0 %v204
  %v234 = vpop.xlane.xlu0 %233
  %235 = vadd.xlane.f32.xlu0 %v205
  %v236 = vpop.xlane.xlu0 %235
  %237 = vadd.xlane.f32.xlu0 %v206
  %v238 = vpop.xlane.xlu0 %237
  %v239 = vmax.f32 %v208, 1e-24
  %v240 = vmax.f32 %v210, 1e-24
  %v241 = vmax.f32 %v212, 1e-24
  %v242 = vmax.f32 %v214, 1e-24
  %v243 = vmax.f32 %v216, 1e-24
  %v244 = vmax.f32 %v218, 1e-24
  %v245 = vmax.f32 %v220, 1e-24
  %v246 = vmax.f32 %v222, 1e-24
  %v247 = vmax.f32 %v224, 1e-24
  %v248 = vmax.f32 %v226, 1e-24
  %v249 = vmax.f32 %v228, 1e-24
  %v250 = vmax.f32 %v230, 1e-24
  %v251 = vmax.f32 %v232, 1e-24
  %v252 = vmax.f32 %v234, 1e-24
  %v253 = vmax.f32 %v236, 1e-24
  %v254 = vmax.f32 %v238, 1e-24
  %v255 = vrsqrt.pop %v239
  %v256 = vrsqrt.pop %v240
  %v257 = vrsqrt.pop %v241
  %v258 = vrsqrt.pop %v242
  %v259 = vrsqrt.pop %v243
  %v260 = vrsqrt.pop %v244
  %v261 = vrsqrt.pop %v245
  %v262 = vrsqrt.pop %v246
  %v263 = vrsqrt.pop %v247
  %v264 = vrsqrt.pop %v248
  %v265 = vrsqrt.pop %v249
  %v266 = vrsqrt.pop %v250
  %v267 = vrsqrt.pop %v251
  %v268 = vrsqrt.pop %v252
  %v269 = vrsqrt.pop %v253
  %v270 = vrsqrt.pop %v254
  %v271 = vmul.f32 %v113, %v255
  %v272 = vmul.f32 %v118, %v256
  %v273 = vmul.f32 %v123, %v257
  %v274 = vmul.f32 %v128, %v258
  %v275 = vmul.f32 %v133, %v259
  %v276 = vmul.f32 %v138, %v260
  %v277 = vmul.f32 %v143, %v261
  %v278 = vmul.f32 %v148, %v262
  %v279 = vmul.f32 %v153, %v263
  %v280 = vmul.f32 %v158, %v264
  %v281 = vmul.f32 %v163, %v265
  %v282 = vmul.f32 %v168, %v266
  %v283 = vmul.f32 %v173, %v267
  %v284 = vmul.f32 %v178, %v268
  %v285 = vmul.f32 %v183, %v269
  %v286 = vmul.f32 %v188, %v270
  %v287 = vld [vmem:[%s2] sm:$0xff]
  %v288 = vld [vmem:[%s2 + $0x8] sm:$0xff]
  %v289 = vld [vmem:[%s2 + $0x10] sm:$0xff]
  %v290 = vld [vmem:[%s2 + $0x18] sm:$0xff]
  %v291 = vld [vmem:[%s2 + $0x20] sm:$0xff]
  %v292 = vld [vmem:[%s2 + $0x28] sm:$0xff]
  %v293 = vld [vmem:[%s2 + $0x30] sm:$0xff]
  %v294 = vld [vmem:[%s2 + $0x38] sm:$0xff]
  %v295 = vld [vmem:[%s2 + $0x40] sm:$0xff]
  %v296 = vld [vmem:[%s2 + $0x48] sm:$0xff]
  %v297 = vld [vmem:[%s2 + $0x50] sm:$0xff]
  %v298 = vld [vmem:[%s2 + $0x58] sm:$0xff]
  %v299 = vld [vmem:[%s2 + $0x60] sm:$0xff]
  %v300 = vld [vmem:[%s2 + $0x68] sm:$0xff]
  %v301 = vld [vmem:[%s2 + $0x70] sm:$0xff]
  %v302 = vld [vmem:[%s2 + $0x78] sm:$0xff]
  %304 = vset.pattern.permute.xlu0 0
  %305 = vperm.xlu0 %304, %v287
  %v306 = vpop.permute.xlu0 %305
  %309 = vset.pattern.permute.xlu0 0
  %310 = vperm.xlu0 %309, %v288
  %v311 = vpop.permute.xlu0 %310
  %314 = vset.pattern.permute.xlu0 0
  %315 = vperm.xlu0 %314, %v289
  %v316 = vpop.permute.xlu0 %315
  %319 = vset.pattern.permute.xlu0 0
  %320 = vperm.xlu0 %319, %v290
  %v321 = vpop.permute.xlu0 %320
  %324 = vset.pattern.permute.xlu0 0
  %325 = vperm.xlu0 %324, %v291
  %v326 = vpop.permute.xlu0 %325
  %329 = vset.pattern.permute.xlu0 0
  %330 = vperm.xlu0 %329, %v292
  %v331 = vpop.permute.xlu0 %330
  %334 = vset.pattern.permute.xlu0 0
  %335 = vperm.xlu0 %334, %v293
  %v336 = vpop.permute.xlu0 %335
  %339 = vset.pattern.permute.xlu0 0
  %340 = vperm.xlu0 %339, %v294
  %v341 = vpop.permute.xlu0 %340
  %344 = vset.pattern.permute.xlu0 0
  %345 = vperm.xlu0 %344, %v295
  %v346 = vpop.permute.xlu0 %345
  %349 = vset.pattern.permute.xlu0 0
  %350 = vperm.xlu0 %349, %v296
  %v351 = vpop.permute.xlu0 %350
  %354 = vset.pattern.permute.xlu0 0
  %355 = vperm.xlu0 %354, %v297
  %v356 = vpop.permute.xlu0 %355
  %359 = vset.pattern.permute.xlu0 0
  %360 = vperm.xlu0 %359, %v298
  %v361 = vpop.permute.xlu0 %360
  %364 = vset.pattern.permute.xlu0 0
  %365 = vperm.xlu0 %364, %v299
  %v366 = vpop.permute.xlu0 %365
  %369 = vset.pattern.permute.xlu0 0
  %370 = vperm.xlu0 %369, %v300
  %v371 = vpop.permute.xlu0 %370
  %374 = vset.pattern.permute.xlu0 0
  %375 = vperm.xlu0 %374, %v301
  %v376 = vpop.permute.xlu0 %375
  %379 = vset.pattern.permute.xlu0 0
  %380 = vperm.xlu0 %379, %v302
  %v381 = vpop.permute.xlu0 %380
  %v383 = vmul.f32 %v306, %v271
  %v384 = vmul.f32 %v311, %v272
  %v385 = vmul.f32 %v316, %v273
  %v386 = vmul.f32 %v321, %v274
  %v387 = vmul.f32 %v326, %v275
  %v388 = vmul.f32 %v331, %v276
  %v389 = vmul.f32 %v336, %v277
  %v390 = vmul.f32 %v341, %v278
  %v391 = vmul.f32 %v346, %v279
  %v392 = vmul.f32 %v351, %v280
  %v393 = vmul.f32 %v356, %v281
  %v394 = vmul.f32 %v361, %v282
  %v395 = vmul.f32 %v366, %v283
  %v396 = vmul.f32 %v371, %v284
  %v397 = vmul.f32 %v376, %v285
  %v398 = vmul.f32 %v381, %v286
  %399 = vst [vmem:[%s3] sm:$0xff] %v383
  %400 = vst [vmem:[%s3 + $0x8] sm:$0xff] %v384
  %401 = vst [vmem:[%s3 + $0x10] sm:$0xff] %v385
  %402 = vst [vmem:[%s3 + $0x18] sm:$0xff] %v386
  %403 = vst [vmem:[%s3 + $0x20] sm:$0xff] %v387
  %404 = vst [vmem:[%s3 + $0x28] sm:$0xff] %v388
  %405 = vst [vmem:[%s3 + $0x30] sm:$0xff] %v389
  %406 = vst [vmem:[%s3 + $0x38] sm:$0xff] %v390
  %407 = vst [vmem:[%s3 + $0x40] sm:$0xff] %v391
  %408 = vst [vmem:[%s3 + $0x48] sm:$0xff] %v392
  %409 = vst [vmem:[%s3 + $0x50] sm:$0xff] %v393
  %410 = vst [vmem:[%s3 + $0x58] sm:$0xff] %v394
  %411 = vst [vmem:[%s3 + $0x60] sm:$0xff] %v395
  %412 = vst [vmem:[%s3 + $0x68] sm:$0xff] %v396
  %413 = vst [vmem:[%s3 + $0x70] sm:$0xff] %v397
  %414 = vst [vmem:[%s3 + $0x78] sm:$0xff] %v398
  // Predicated region
  $region14: #{gncae_forward.5} parent=0 // pred_check
    _
  $region15: #{gncae_forward.5} parent=0 // pred_check_branch
    %416 = sbr.rel (0) target = $region17
  $region16: #{gncae_forward.5} parent=0 // pred_region
    _
  $region17: #{gncae_forward.5} parent=0 // pred_fallthru
    _
  // Predicated region
  $region18: #{gncae_forward.5} parent=0 // pred_check
    _
  $region19: #{gncae_forward.5} parent=0 // pred_check_branch
    %418 = sbr.rel (0) target = $region21
  $region20: #{gncae_forward.5} parent=0 // pred_region
    _
  $region21: #{gncae_forward.5} parent=0 // pred_fallthru
    _

// kernel: gncae_forward.6
$region0: #{gncae_forward.6}
  #allocation0 [shape = 'u32[]', space=smem, size = 0x4, offset = 0x4, fixed_abs, tag = 'smem constant byte address 0x4 - core index']
  #allocation1 [shape = 'u32[144,128]{1,0:T(1,128)}', space=vmem, size = 0x12000, scoped, tag = 'internal scratch']
  #allocation2 [shape = 'f32[128,128]{1,0:T(8,128)}', space=vmem, size = 0x10000, scoped, tag = 'scratch operand']
  %s0 = inlined_call_operand.vmem [shape: bf16[128,128], index: 0, kind: input, shape index: {}]
  %s1 = inlined_call_operand.vmem [shape: f32[128,128], index: 1, kind: input, shape index: {}, may-alias: {1,2}]
  %s2 = inlined_call_operand.vmem [shape: f32[128,128], index: 2, kind: input, shape index: {}, may-alias: {1,2}]
  %s3 = inlined_call_operand.vmem [shape: f32[128,1], index: 3, kind: input, shape index: {}]
  %s4 = inlined_call_operand.vmem [shape: f32[128,128], index: 4, kind: output, shape index: {}]
  %s5 = sld [smem:[#allocation0]]
  $region34: #{gncae_forward.6} parent=0
    _
  %s7 = ssub.s32 1, %s5
  %s8 = scalar_select 0, %s7, %s5
  // Predicated region
  $region2: #{gncae_forward.6} parent=0 // pred_check
    _
  $region3: #{gncae_forward.6} parent=0 // pred_check_branch
    %10 = sbr.rel (0) target = $region5
  $region4: #{gncae_forward.6} parent=0 // pred_region
    _
  $region5: #{gncae_forward.6} parent=0 // pred_fallthru
    _
  // Predicated region
  $region6: #{gncae_forward.6} parent=0 // pred_check
    _
  $region7: #{gncae_forward.6} parent=0 // pred_check_branch
    %12 = sbr.rel (0) target = $region9
  $region8: #{gncae_forward.6} parent=0 // pred_region
    _
  $region9: #{gncae_forward.6} parent=0 // pred_fallthru
    _
  // Predicated region
  $region10: #{gncae_forward.6} parent=0 // pred_check
    _
  $region11: #{gncae_forward.6} parent=0 // pred_check_branch
    %14 = sbr.rel (0) target = $region13
  $region12: #{gncae_forward.6} parent=0 // pred_region
    _
  $region13: #{gncae_forward.6} parent=0 // pred_fallthru
    _
  // Predicated region
  $region14: #{gncae_forward.6} parent=0 // pred_check
    _
  $region15: #{gncae_forward.6} parent=0 // pred_check_branch
    %16 = sbr.rel (0) target = $region17
  $region16: #{gncae_forward.6} parent=0 // pred_region
    _
  $region17: #{gncae_forward.6} parent=0 // pred_fallthru
    _
  %p17 = scmp.eq.s32.totalorder 0, 0
  // Predicated region
  $region18: #{gncae_forward.6} parent=0 // pred_check
    %p18 = pneg %p17
  $region19: #{gncae_forward.6} parent=0 // pred_check_branch
    %20 = sbr.rel (%p18) target = $region21
  $region20: #{gncae_forward.6} parent=0 // pred_region
    %v21 = vld [vmem:[%s2] sm:$0xff]
    %v22 = vld [vmem:[%s2 + $0x8] sm:$0xff]
    %v23 = vld [vmem:[%s2 + $0x10] sm:$0xff]
    %v24 = vld [vmem:[%s2 + $0x18] sm:$0xff]
    %v25 = vld [vmem:[%s2 + $0x20] sm:$0xff]
    %v26 = vld [vmem:[%s2 + $0x28] sm:$0xff]
    %v27 = vld [vmem:[%s2 + $0x30] sm:$0xff]
    %v28 = vld [vmem:[%s2 + $0x38] sm:$0xff]
    %v29 = vld [vmem:[%s2 + $0x40] sm:$0xff]
    %v30 = vld [vmem:[%s2 + $0x48] sm:$0xff]
    %v31 = vld [vmem:[%s2 + $0x50] sm:$0xff]
    %v32 = vld [vmem:[%s2 + $0x58] sm:$0xff]
    %v33 = vld [vmem:[%s2 + $0x60] sm:$0xff]
    %v34 = vld [vmem:[%s2 + $0x68] sm:$0xff]
    %v35 = vld [vmem:[%s2 + $0x70] sm:$0xff]
    %v36 = vld [vmem:[%s2 + $0x78] sm:$0xff]
    %37 = vst [vmem:[#allocation2] sm:$0xff] %v21
    %38 = vst [vmem:[#allocation2 + $0x8] sm:$0xff] %v22
    %39 = vst [vmem:[#allocation2 + $0x10] sm:$0xff] %v23
    %40 = vst [vmem:[#allocation2 + $0x18] sm:$0xff] %v24
    %41 = vst [vmem:[#allocation2 + $0x20] sm:$0xff] %v25
    %42 = vst [vmem:[#allocation2 + $0x28] sm:$0xff] %v26
    %43 = vst [vmem:[#allocation2 + $0x30] sm:$0xff] %v27
    %44 = vst [vmem:[#allocation2 + $0x38] sm:$0xff] %v28
    %45 = vst [vmem:[#allocation2 + $0x40] sm:$0xff] %v29
    %46 = vst [vmem:[#allocation2 + $0x48] sm:$0xff] %v30
    %47 = vst [vmem:[#allocation2 + $0x50] sm:$0xff] %v31
    %48 = vst [vmem:[#allocation2 + $0x58] sm:$0xff] %v32
    %49 = vst [vmem:[#allocation2 + $0x60] sm:$0xff] %v33
    %50 = vst [vmem:[#allocation2 + $0x68] sm:$0xff] %v34
    %51 = vst [vmem:[#allocation2 + $0x70] sm:$0xff] %v35
    %52 = vst [vmem:[#allocation2 + $0x78] sm:$0xff] %v36
  $region21: #{gncae_forward.6} parent=0 // pred_fallthru
    _
  %v53 = vld [vmem:[#allocation2] sm:$0xff]
  %v54 = vld [vmem:[#allocation2 + $0x8] sm:$0xff]
  %v55 = vld [vmem:[#allocation2 + $0x10] sm:$0xff]
  %v56 = vld [vmem:[#allocation2 + $0x18] sm:$0xff]
  %v57 = vld [vmem:[#allocation2 + $0x20] sm:$0xff]
  %v58 = vld [vmem:[#allocation2 + $0x28] sm:$0xff]
  %v59 = vld [vmem:[#allocation2 + $0x30] sm:$0xff]
  %v60 = vld [vmem:[#allocation2 + $0x38] sm:$0xff]
  %v61 = vld [vmem:[#allocation2 + $0x40] sm:$0xff]
  %v62 = vld [vmem:[#allocation2 + $0x48] sm:$0xff]
  %v63 = vld [vmem:[#allocation2 + $0x50] sm:$0xff]
  %v64 = vld [vmem:[#allocation2 + $0x58] sm:$0xff]
  %v65 = vld [vmem:[#allocation2 + $0x60] sm:$0xff]
  %v66 = vld [vmem:[#allocation2 + $0x68] sm:$0xff]
  %v67 = vld [vmem:[#allocation2 + $0x70] sm:$0xff]
  %v68 = vld [vmem:[#allocation2 + $0x78] sm:$0xff]
  %v69 = vld [vmem:[%s0] sm:$0xf]
  %v70 = vld [vmem:[%s0 + $0x4] sm:$0xf]
  %v71 = vld [vmem:[%s0 + $0x8] sm:$0xf]
  %v72 = vld [vmem:[%s0 + $0xc] sm:$0xf]
  %v73 = vld [vmem:[%s0 + $0x10] sm:$0xf]
  %v74 = vld [vmem:[%s0 + $0x14] sm:$0xf]
  %v75 = vld [vmem:[%s0 + $0x18] sm:$0xf]
  %v76 = vld [vmem:[%s0 + $0x1c] sm:$0xf]
  %v77 = vld [vmem:[%s0 + $0x20] sm:$0xf]
  %v78 = vld [vmem:[%s0 + $0x24] sm:$0xf]
  %v79 = vld [vmem:[%s0 + $0x28] sm:$0xf]
  %v80 = vld [vmem:[%s0 + $0x2c] sm:$0xf]
  %v81 = vld [vmem:[%s0 + $0x30] sm:$0xf]
  %v82 = vld [vmem:[%s0 + $0x34] sm:$0xf]
  %v83 = vld [vmem:[%s0 + $0x38] sm:$0xf]
  %v84 = vld [vmem:[%s0 + $0x3c] sm:$0xf]
  %v85 = vunpack.c.l.bf16 %v69
  %v86 = vunpack.c.l.bf16 %v70
  %v87 = vunpack.c.l.bf16 %v71
  %v88 = vunpack.c.l.bf16 %v72
  %v89 = vunpack.c.l.bf16 %v73
  %v90 = vunpack.c.l.bf16 %v74
  %v91 = vunpack.c.l.bf16 %v75
  %v92 = vunpack.c.l.bf16 %v76
  %v93 = vunpack.c.l.bf16 %v77
  %v94 = vunpack.c.l.bf16 %v78
  %v95 = vunpack.c.l.bf16 %v79
  %v96 = vunpack.c.l.bf16 %v80
  %v97 = vunpack.c.l.bf16 %v81
  %v98 = vunpack.c.l.bf16 %v82
  %v99 = vunpack.c.l.bf16 %v83
  %v100 = vunpack.c.l.bf16 %v84
  %v101 = vld [vmem:[%s1] sm:$0xff]
  %v102 = vld [vmem:[%s1 + $0x8] sm:$0xff]
  %v103 = vld [vmem:[%s1 + $0x10] sm:$0xff]
  %v104 = vld [vmem:[%s1 + $0x18] sm:$0xff]
  %v105 = vld [vmem:[%s1 + $0x20] sm:$0xff]
  %v106 = vld [vmem:[%s1 + $0x28] sm:$0xff]
  %v107 = vld [vmem:[%s1 + $0x30] sm:$0xff]
  %v108 = vld [vmem:[%s1 + $0x38] sm:$0xff]
  %v109 = vld [vmem:[%s1 + $0x40] sm:$0xff]
  %v110 = vld [vmem:[%s1 + $0x48] sm:$0xff]
  %v111 = vld [vmem:[%s1 + $0x50] sm:$0xff]
  %v112 = vld [vmem:[%s1 + $0x58] sm:$0xff]
  %v113 = vld [vmem:[%s1 + $0x60] sm:$0xff]
  %v114 = vld [vmem:[%s1 + $0x68] sm:$0xff]
  %v115 = vld [vmem:[%s1 + $0x70] sm:$0xff]
  %v116 = vld [vmem:[%s1 + $0x78] sm:$0xff]
  %117 = vmatprep.subr.mxu0 0.0
  %118 = vmatpush1.msra.mxu0 %v101
  %119 = vmatprep.subr.mxu0 0.0
  %120 = vmatpush1.msra.mxu0 %v102
  %121 = vmatprep.subr.mxu0 0.0
  %122 = vmatpush1.msra.mxu0 %v103
  %123 = vmatprep.subr.mxu0 0.0
  %124 = vmatpush1.msra.mxu0 %v104
  %125 = vmatprep.subr.mxu0 0.0
  %126 = vmatpush1.msra.mxu0 %v105
  %127 = vmatprep.subr.mxu0 0.0
  %128 = vmatpush1.msra.mxu0 %v106
  %129 = vmatprep.subr.mxu0 0.0
  %130 = vmatpush1.msra.mxu0 %v107
  %131 = vmatprep.subr.mxu0 0.0
  %132 = vmatpush1.msra.mxu0 %v108
  %133 = vmatprep.subr.mxu0 0.0
  %134 = vmatpush1.msra.mxu0 %v109
  %135 = vmatprep.subr.mxu0 0.0
  %136 = vmatpush1.msra.mxu0 %v110
  %137 = vmatprep.subr.mxu0 0.0
  %138 = vmatpush1.msra.mxu0 %v111
  %139 = vmatprep.subr.mxu0 0.0
  %140 = vmatpush1.msra.mxu0 %v112
  %141 = vmatprep.subr.mxu0 0.0
  %142 = vmatpush1.msra.mxu0 %v113
  %143 = vmatprep.subr.mxu0 0.0
  %144 = vmatpush1.msra.mxu0 %v114
  %145 = vmatprep.subr.mxu0 0.0
  %146 = vmatpush1.msra.mxu0 %v115
  %147 = vmatprep.subr.mxu0 0.0
  %148 = vmatpush1.msra.mxu0 %v116
  %149 = vmatprep.subr.mxu0 0.0
  %150 = vmatpush1.msra.mxu0 0.0
  %151 = vmatprep.subr.mxu0 0.0
  %152 = vmatpush1.msra.mxu0 0.0
  %153 = vmatprep.subr.mxu0 0.0
  %154 = vmatpush1.msra.mxu0 0.0
  %155 = vmatprep.subr.mxu0 0.0
  %156 = vmatpush1.msra.mxu0 0.0
  %157 = vmatprep.subr.mxu0 0.0
  %158 = vmatpush1.msra.mxu0 0.0
  %159 = vmatprep.subr.mxu0 0.0
  %160 = vmatpush1.msra.mxu0 0.0
  %161 = vmatprep.subr.mxu0 0.0
  %162 = vmatpush1.msra.mxu0 0.0
  %163 = vmatprep.subr.mxu0 0.0
  %164 = vmatpush1.msra.mxu0 0.0
  %165 = vmatprep.subr.mxu0 0.0
  %166 = vmatpush1.msra.mxu0 0.0
  %167 = vmatprep.subr.mxu0 0.0
  %168 = vmatpush1.msra.mxu0 0.0
  %169 = vmatprep.subr.mxu0 0.0
  %170 = vmatpush1.msra.mxu0 0.0
  %171 = vmatprep.subr.mxu0 0.0
  %172 = vmatpush1.msra.mxu0 0.0
  %173 = vmatprep.subr.mxu0 0.0
  %174 = vmatpush1.msra.mxu0 0.0
  %175 = vmatprep.subr.mxu0 0.0
  %176 = vmatpush1.msra.mxu0 0.0
  %177 = vmatprep.subr.mxu0 0.0
  %178 = vmatpush1.msra.mxu0 0.0
  %179 = vmatprep.subr.mxu0 0.0
  %180 = vmatpush1.msra.mxu0 0.0
  %181 = vmatprep.mubr.f32.mxu0 0.0
  %182 = vmatmul.mubr.f32.gmra.mrb[0].mxu0 %v85
  %v183 = vpop.f32.mrb[0].mxu0
  %v184 = vadd.f32 0.0, %v183
  %v185 = vpop.f32.mrb[0].mxu0
  %186 = vmatprep.mubr.f32.mxu0 0.0
  %187 = vmatmul.mubr.f32.gmra.mrb[0].mxu0 %v86
  %v188 = vpop.f32.mrb[0].mxu0
  %v189 = vadd.f32 0.0, %v188
  %v190 = vpop.f32.mrb[0].mxu0
  %191 = vmatprep.mubr.f32.mxu0 0.0
  %192 = vmatmul.mubr.f32.gmra.mrb[0].mxu0 %v87
  %v193 = vpop.f32.mrb[0].mxu0
  %v194 = vadd.f32 0.0, %v193
  %v195 = vpop.f32.mrb[0].mxu0
  %196 = vmatprep.mubr.f32.mxu0 0.0
  %197 = vmatmul.mubr.f32.gmra.mrb[0].mxu0 %v88
  %v198 = vpop.f32.mrb[0].mxu0
  %v199 = vadd.f32 0.0, %v198
  %v200 = vpop.f32.mrb[0].mxu0
  %201 = vmatprep.mubr.f32.mxu0 0.0
  %202 = vmatmul.mubr.f32.gmra.mrb[0].mxu0 %v89
  %v203 = vpop.f32.mrb[0].mxu0
  %v204 = vadd.f32 0.0, %v203
  %v205 = vpop.f32.mrb[0].mxu0
  %206 = vmatprep.mubr.f32.mxu0 0.0
  %207 = vmatmul.mubr.f32.gmra.mrb[0].mxu0 %v90
  %v208 = vpop.f32.mrb[0].mxu0
  %v209 = vadd.f32 0.0, %v208
  %v210 = vpop.f32.mrb[0].mxu0
  %211 = vmatprep.mubr.f32.mxu0 0.0
  %212 = vmatmul.mubr.f32.gmra.mrb[0].mxu0 %v91
  %v213 = vpop.f32.mrb[0].mxu0
  %v214 = vadd.f32 0.0, %v213
  %v215 = vpop.f32.mrb[0].mxu0
  %216 = vmatprep.mubr.f32.mxu0 0.0
  %217 = vmatmul.mubr.f32.gmra.mrb[0].mxu0 %v92
  %v218 = vpop.f32.mrb[0].mxu0
  %v219 = vadd.f32 0.0, %v218
  %v220 = vpop.f32.mrb[0].mxu0
  %221 = vmatprep.mubr.f32.mxu0 0.0
  %222 = vmatmul.mubr.f32.gmra.mrb[0].mxu0 %v93
  %v223 = vpop.f32.mrb[0].mxu0
  %v224 = vadd.f32 0.0, %v223
  %v225 = vpop.f32.mrb[0].mxu0
  %226 = vmatprep.mubr.f32.mxu0 0.0
  %227 = vmatmul.mubr.f32.gmra.mrb[0].mxu0 %v94
  %v228 = vpop.f32.mrb[0].mxu0
  %v229 = vadd.f32 0.0, %v228
  %v230 = vpop.f32.mrb[0].mxu0
  %231 = vmatprep.mubr.f32.mxu0 0.0
  %232 = vmatmul.mubr.f32.gmra.mrb[0].mxu0 %v95
  %v233 = vpop.f32.mrb[0].mxu0
  %v234 = vadd.f32 0.0, %v233
  %v235 = vpop.f32.mrb[0].mxu0
  %236 = vmatprep.mubr.f32.mxu0 0.0
  %237 = vmatmul.mubr.f32.gmra.mrb[0].mxu0 %v96
  %v238 = vpop.f32.mrb[0].mxu0
  %v239 = vadd.f32 0.0, %v238
  %v240 = vpop.f32.mrb[0].mxu0
  %241 = vmatprep.mubr.f32.mxu0 0.0
  %242 = vmatmul.mubr.f32.gmra.mrb[0].mxu0 %v97
  %v243 = vpop.f32.mrb[0].mxu0
  %v244 = vadd.f32 0.0, %v243
  %v245 = vpop.f32.mrb[0].mxu0
  %246 = vmatprep.mubr.f32.mxu0 0.0
  %247 = vmatmul.mubr.f32.gmra.mrb[0].mxu0 %v98
  %v248 = vpop.f32.mrb[0].mxu0
  %v249 = vadd.f32 0.0, %v248
  %v250 = vpop.f32.mrb[0].mxu0
  %251 = vmatprep.mubr.f32.mxu0 0.0
  %252 = vmatmul.mubr.f32.gmra.mrb[0].mxu0 %v99
  %v253 = vpop.f32.mrb[0].mxu0
  %v254 = vadd.f32 0.0, %v253
  %v255 = vpop.f32.mrb[0].mxu0
  %256 = vmatprep.mubr.f32.mxu0 0.0
  %257 = vmatmul.mubr.f32.gmra.mrb[0].mxu0 %v100
  %v258 = vpop.f32.mrb[0].mxu0
  %v259 = vadd.f32 0.0, %v258
  %v260 = vpop.f32.mrb[0].mxu0
  %261 = vdwg.mxu0
  %v262 = vadd.f32 %v53, %v184
  %v263 = vadd.f32 %v54, %v189
  %v264 = vadd.f32 %v55, %v194
  %v265 = vadd.f32 %v56, %v199
  %v266 = vadd.f32 %v57, %v204
  %v267 = vadd.f32 %v58, %v209
  %v268 = vadd.f32 %v59, %v214
  %v269 = vadd.f32 %v60, %v219
  %v270 = vadd.f32 %v61, %v224
  %v271 = vadd.f32 %v62, %v229
  %v272 = vadd.f32 %v63, %v234
  %v273 = vadd.f32 %v64, %v239
  %v274 = vadd.f32 %v65, %v244
  %v275 = vadd.f32 %v66, %v249
  %v276 = vadd.f32 %v67, %v254
  %v277 = vadd.f32 %v68, %v259
  %278 = vst [vmem:[#allocation2] sm:$0xff] %v262
  %279 = vst [vmem:[#allocation2 + $0x8] sm:$0xff] %v263
  %280 = vst [vmem:[#allocation2 + $0x10] sm:$0xff] %v264
  %281 = vst [vmem:[#allocation2 + $0x18] sm:$0xff] %v265
  %282 = vst [vmem:[#allocation2 + $0x20] sm:$0xff] %v266
  %283 = vst [vmem:[#allocation2 + $0x28] sm:$0xff] %v267
  %284 = vst [vmem:[#allocation2 + $0x30] sm:$0xff] %v268
  %285 = vst [vmem:[#allocation2 + $0x38] sm:$0xff] %v269
  %286 = vst [vmem:[#allocation2 + $0x40] sm:$0xff] %v270
  %287 = vst [vmem:[#allocation2 + $0x48] sm:$0xff] %v271
  %288 = vst [vmem:[#allocation2 + $0x50] sm:$0xff] %v272
  %289 = vst [vmem:[#allocation2 + $0x58] sm:$0xff] %v273
  %290 = vst [vmem:[#allocation2 + $0x60] sm:$0xff] %v274
  %291 = vst [vmem:[#allocation2 + $0x68] sm:$0xff] %v275
  %292 = vst [vmem:[#allocation2 + $0x70] sm:$0xff] %v276
  %293 = vst [vmem:[#allocation2 + $0x78] sm:$0xff] %v277
  // Predicated region
  $region22: #{gncae_forward.6} parent=0 // pred_check
    %p294 = pneg %p17
  $region23: #{gncae_forward.6} parent=0 // pred_check_branch
    %296 = sbr.rel (%p294) target = $region25
  $region24: #{gncae_forward.6} parent=0 // pred_region
    %v297 = vld [vmem:[%s3] sm:$0xff]
    %v298 = vld [vmem:[%s3 + $0x8] sm:$0xff]
    %v299 = vld [vmem:[%s3 + $0x10] sm:$0xff]
    %v300 = vld [vmem:[%s3 + $0x18] sm:$0xff]
    %v301 = vld [vmem:[%s3 + $0x20] sm:$0xff]
    %v302 = vld [vmem:[%s3 + $0x28] sm:$0xff]
    %v303 = vld [vmem:[%s3 + $0x30] sm:$0xff]
    %v304 = vld [vmem:[%s3 + $0x38] sm:$0xff]
    %v305 = vld [vmem:[%s3 + $0x40] sm:$0xff]
    %v306 = vld [vmem:[%s3 + $0x48] sm:$0xff]
    %v307 = vld [vmem:[%s3 + $0x50] sm:$0xff]
    %v308 = vld [vmem:[%s3 + $0x58] sm:$0xff]
    %v309 = vld [vmem:[%s3 + $0x60] sm:$0xff]
    %v310 = vld [vmem:[%s3 + $0x68] sm:$0xff]
    %v311 = vld [vmem:[%s3 + $0x70] sm:$0xff]
    %v312 = vld [vmem:[%s3 + $0x78] sm:$0xff]
    %v313 = vld [vmem:[#allocation2] sm:$0xff]
    %v314 = vld [vmem:[#allocation2 + $0x8] sm:$0xff]
    %v315 = vld [vmem:[#allocation2 + $0x10] sm:$0xff]
    %v316 = vld [vmem:[#allocation2 + $0x18] sm:$0xff]
    %v317 = vld [vmem:[#allocation2 + $0x20] sm:$0xff]
    %v318 = vld [vmem:[#allocation2 + $0x28] sm:$0xff]
    %v319 = vld [vmem:[#allocation2 + $0x30] sm:$0xff]
    %v320 = vld [vmem:[#allocation2 + $0x38] sm:$0xff]
    %v321 = vld [vmem:[#allocation2 + $0x40] sm:$0xff]
    %v322 = vld [vmem:[#allocation2 + $0x48] sm:$0xff]
    %v323 = vld [vmem:[#allocation2 + $0x50] sm:$0xff]
    %v324 = vld [vmem:[#allocation2 + $0x58] sm:$0xff]
    %v325 = vld [vmem:[#allocation2 + $0x60] sm:$0xff]
    %v326 = vld [vmem:[#allocation2 + $0x68] sm:$0xff]
    %v327 = vld [vmem:[#allocation2 + $0x70] sm:$0xff]
    %v328 = vld [vmem:[#allocation2 + $0x78] sm:$0xff]
    %330 = vset.pattern.permute.xlu0 0
    %331 = vperm.xlu0 %330, %v297
    %v332 = vpop.permute.xlu0 %331
    %335 = vset.pattern.permute.xlu0 0
    %336 = vperm.xlu0 %335, %v298
    %v337 = vpop.permute.xlu0 %336
    %340 = vset.pattern.permute.xlu0 0
    %341 = vperm.xlu0 %340, %v299
    %v342 = vpop.permute.xlu0 %341
    %345 = vset.pattern.permute.xlu0 0
    %346 = vperm.xlu0 %345, %v300
    %v347 = vpop.permute.xlu0 %346
    %350 = vset.pattern.permute.xlu0 0
    %351 = vperm.xlu0 %350, %v301
    %v352 = vpop.permute.xlu0 %351
    %355 = vset.pattern.permute.xlu0 0
    %356 = vperm.xlu0 %355, %v302
    %v357 = vpop.permute.xlu0 %356
    %360 = vset.pattern.permute.xlu0 0
    %361 = vperm.xlu0 %360, %v303
    %v362 = vpop.permute.xlu0 %361
    %365 = vset.pattern.permute.xlu0 0
    %366 = vperm.xlu0 %365, %v304
    %v367 = vpop.permute.xlu0 %366
    %370 = vset.pattern.permute.xlu0 0
    %371 = vperm.xlu0 %370, %v305
    %v372 = vpop.permute.xlu0 %371
    %375 = vset.pattern.permute.xlu0 0
    %376 = vperm.xlu0 %375, %v306
    %v377 = vpop.permute.xlu0 %376
    %380 = vset.pattern.permute.xlu0 0
    %381 = vperm.xlu0 %380, %v307
    %v382 = vpop.permute.xlu0 %381
    %385 = vset.pattern.permute.xlu0 0
    %386 = vperm.xlu0 %385, %v308
    %v387 = vpop.permute.xlu0 %386
    %390 = vset.pattern.permute.xlu0 0
    %391 = vperm.xlu0 %390, %v309
    %v392 = vpop.permute.xlu0 %391
    %395 = vset.pattern.permute.xlu0 0
    %396 = vperm.xlu0 %395, %v310
    %v397 = vpop.permute.xlu0 %396
    %400 = vset.pattern.permute.xlu0 0
    %401 = vperm.xlu0 %400, %v311
    %v402 = vpop.permute.xlu0 %401
    %405 = vset.pattern.permute.xlu0 0
    %406 = vperm.xlu0 %405, %v312
    %v407 = vpop.permute.xlu0 %406
    %v409 = vmul.f32 %v332, %v313
    %v410 = vmul.f32 %v337, %v314
    %v411 = vmul.f32 %v342, %v315
    %v412 = vmul.f32 %v347, %v316
    %v413 = vmul.f32 %v352, %v317
    %v414 = vmul.f32 %v357, %v318
    %v415 = vmul.f32 %v362, %v319
    %v416 = vmul.f32 %v367, %v320
    %v417 = vmul.f32 %v372, %v321
    %v418 = vmul.f32 %v377, %v322
    %v419 = vmul.f32 %v382, %v323
    %v420 = vmul.f32 %v387, %v324
    %v421 = vmul.f32 %v392, %v325
    %v422 = vmul.f32 %v397, %v326
    %v423 = vmul.f32 %v402, %v327
    %v424 = vmul.f32 %v407, %v328
    %v425 = vmax.f32 %v409, 0.0
    %v426 = vmax.f32 %v410, 0.0
    %v427 = vmax.f32 %v411, 0.0
    %v428 = vmax.f32 %v412, 0.0
    %v429 = vmax.f32 %v413, 0.0
    %v430 = vmax.f32 %v414, 0.0
    %v431 = vmax.f32 %v415, 0.0
    %v432 = vmax.f32 %v416, 0.0
    %v433 = vmax.f32 %v417, 0.0
    %v434 = vmax.f32 %v418, 0.0
    %v435 = vmax.f32 %v419, 0.0
    %v436 = vmax.f32 %v420, 0.0
    %v437 = vmax.f32 %v421, 0.0
    %v438 = vmax.f32 %v422, 0.0
    %v439 = vmax.f32 %v423, 0.0
    %v440 = vmax.f32 %v424, 0.0
    %441 = vst [vmem:[%s4] sm:$0xff] %v425
    %442 = vst [vmem:[%s4 + $0x8] sm:$0xff] %v426
    %443 = vst [vmem:[%s4 + $0x10] sm:$0xff] %v427
    %444 = vst [vmem:[%s4 + $0x18] sm:$0xff] %v428
    %445 = vst [vmem:[%s4 + $0x20] sm:$0xff] %v429
    %446 = vst [vmem:[%s4 + $0x28] sm:$0xff] %v430
    %447 = vst [vmem:[%s4 + $0x30] sm:$0xff] %v431
    %448 = vst [vmem:[%s4 + $0x38] sm:$0xff] %v432
    %449 = vst [vmem:[%s4 + $0x40] sm:$0xff] %v433
    %450 = vst [vmem:[%s4 + $0x48] sm:$0xff] %v434
    %451 = vst [vmem:[%s4 + $0x50] sm:$0xff] %v435
    %452 = vst [vmem:[%s4 + $0x58] sm:$0xff] %v436
    %453 = vst [vmem:[%s4 + $0x60] sm:$0xff] %v437
    %454 = vst [vmem:[%s4 + $0x68] sm:$0xff] %v438
    %455 = vst [vmem:[%s4 + $0x70] sm:$0xff] %v439
    %456 = vst [vmem:[%s4 + $0x78] sm:$0xff] %v440
  $region25: #{gncae_forward.6} parent=0 // pred_fallthru
    _
  // Predicated region
  $region26: #{gncae_forward.6} parent=0 // pred_check
    _
  $region27: #{gncae_forward.6} parent=0 // pred_check_branch
    %458 = sbr.rel (0) target = $region29
  $region28: #{gncae_forward.6} parent=0 // pred_region
    _
  $region29: #{gncae_forward.6} parent=0 // pred_fallthru
    _
  // Predicated region
  $region30: #{gncae_forward.6} parent=0 // pred_check
    _
  $region31: #{gncae_forward.6} parent=0 // pred_check_branch
    %460 = sbr.rel (0) target = $region33
  $region32: #{gncae_forward.6} parent=0 // pred_region
    _
  $region33: #{gncae_forward.6} parent=0 // pred_fallthru
    _

// kernel: gncae_forward.8
$region0: #{gncae_forward.8}
  #allocation0 [shape = 'u32[]', space=smem, size = 0x4, offset = 0x4, fixed_abs, tag = 'smem constant byte address 0x4 - core index']
  #allocation1 [shape = 'u32[144,128]{1,0:T(1,128)}', space=vmem, size = 0x12000, scoped, tag = 'internal scratch']
  #allocation2 [shape = 'f32[128,128]{1,0:T(8,128)}', space=vmem, size = 0x10000, scoped, tag = 'scratch operand']
  %s0 = inlined_call_operand.vmem [shape: bf16[128,128], index: 0, kind: input, shape index: {}]
  %s1 = inlined_call_operand.vmem [shape: f32[128,128], index: 1, kind: input, shape index: {}, may-alias: {1,2}]
  %s2 = inlined_call_operand.vmem [shape: f32[128,128], index: 2, kind: input, shape index: {}, may-alias: {1,2}]
  %s3 = inlined_call_operand.vmem [shape: f32[128,1], index: 3, kind: input, shape index: {}]
  %s4 = inlined_call_operand.vmem [shape: f32[128,128], index: 4, kind: output, shape index: {}]
  %s5 = sld [smem:[#allocation0]]
  $region34: #{gncae_forward.8} parent=0
    _
  %s7 = ssub.s32 1, %s5
  %s8 = scalar_select 0, %s7, %s5
  // Predicated region
  $region2: #{gncae_forward.8} parent=0 // pred_check
    _
  $region3: #{gncae_forward.8} parent=0 // pred_check_branch
    %10 = sbr.rel (0) target = $region5
  $region4: #{gncae_forward.8} parent=0 // pred_region
    _
  $region5: #{gncae_forward.8} parent=0 // pred_fallthru
    _
  // Predicated region
  $region6: #{gncae_forward.8} parent=0 // pred_check
    _
  $region7: #{gncae_forward.8} parent=0 // pred_check_branch
    %12 = sbr.rel (0) target = $region9
  $region8: #{gncae_forward.8} parent=0 // pred_region
    _
  $region9: #{gncae_forward.8} parent=0 // pred_fallthru
    _
  // Predicated region
  $region10: #{gncae_forward.8} parent=0 // pred_check
    _
  $region11: #{gncae_forward.8} parent=0 // pred_check_branch
    %14 = sbr.rel (0) target = $region13
  $region12: #{gncae_forward.8} parent=0 // pred_region
    _
  $region13: #{gncae_forward.8} parent=0 // pred_fallthru
    _
  // Predicated region
  $region14: #{gncae_forward.8} parent=0 // pred_check
    _
  $region15: #{gncae_forward.8} parent=0 // pred_check_branch
    %16 = sbr.rel (0) target = $region17
  $region16: #{gncae_forward.8} parent=0 // pred_region
    _
  $region17: #{gncae_forward.8} parent=0 // pred_fallthru
    _
  %p17 = scmp.eq.s32.totalorder 0, 0
  // Predicated region
  $region18: #{gncae_forward.8} parent=0 // pred_check
    %p18 = pneg %p17
  $region19: #{gncae_forward.8} parent=0 // pred_check_branch
    %20 = sbr.rel (%p18) target = $region21
  $region20: #{gncae_forward.8} parent=0 // pred_region
    %v21 = vld [vmem:[%s2] sm:$0xff]
    %v22 = vld [vmem:[%s2 + $0x8] sm:$0xff]
    %v23 = vld [vmem:[%s2 + $0x10] sm:$0xff]
    %v24 = vld [vmem:[%s2 + $0x18] sm:$0xff]
    %v25 = vld [vmem:[%s2 + $0x20] sm:$0xff]
    %v26 = vld [vmem:[%s2 + $0x28] sm:$0xff]
    %v27 = vld [vmem:[%s2 + $0x30] sm:$0xff]
    %v28 = vld [vmem:[%s2 + $0x38] sm:$0xff]
    %v29 = vld [vmem:[%s2 + $0x40] sm:$0xff]
    %v30 = vld [vmem:[%s2 + $0x48] sm:$0xff]
    %v31 = vld [vmem:[%s2 + $0x50] sm:$0xff]
    %v32 = vld [vmem:[%s2 + $0x58] sm:$0xff]
    %v33 = vld [vmem:[%s2 + $0x60] sm:$0xff]
    %v34 = vld [vmem:[%s2 + $0x68] sm:$0xff]
    %v35 = vld [vmem:[%s2 + $0x70] sm:$0xff]
    %v36 = vld [vmem:[%s2 + $0x78] sm:$0xff]
    %37 = vst [vmem:[#allocation2] sm:$0xff] %v21
    %38 = vst [vmem:[#allocation2 + $0x8] sm:$0xff] %v22
    %39 = vst [vmem:[#allocation2 + $0x10] sm:$0xff] %v23
    %40 = vst [vmem:[#allocation2 + $0x18] sm:$0xff] %v24
    %41 = vst [vmem:[#allocation2 + $0x20] sm:$0xff] %v25
    %42 = vst [vmem:[#allocation2 + $0x28] sm:$0xff] %v26
    %43 = vst [vmem:[#allocation2 + $0x30] sm:$0xff] %v27
    %44 = vst [vmem:[#allocation2 + $0x38] sm:$0xff] %v28
    %45 = vst [vmem:[#allocation2 + $0x40] sm:$0xff] %v29
    %46 = vst [vmem:[#allocation2 + $0x48] sm:$0xff] %v30
    %47 = vst [vmem:[#allocation2 + $0x50] sm:$0xff] %v31
    %48 = vst [vmem:[#allocation2 + $0x58] sm:$0xff] %v32
    %49 = vst [vmem:[#allocation2 + $0x60] sm:$0xff] %v33
    %50 = vst [vmem:[#allocation2 + $0x68] sm:$0xff] %v34
    %51 = vst [vmem:[#allocation2 + $0x70] sm:$0xff] %v35
    %52 = vst [vmem:[#allocation2 + $0x78] sm:$0xff] %v36
  $region21: #{gncae_forward.8} parent=0 // pred_fallthru
    _
  %v53 = vld [vmem:[#allocation2] sm:$0xff]
  %v54 = vld [vmem:[#allocation2 + $0x8] sm:$0xff]
  %v55 = vld [vmem:[#allocation2 + $0x10] sm:$0xff]
  %v56 = vld [vmem:[#allocation2 + $0x18] sm:$0xff]
  %v57 = vld [vmem:[#allocation2 + $0x20] sm:$0xff]
  %v58 = vld [vmem:[#allocation2 + $0x28] sm:$0xff]
  %v59 = vld [vmem:[#allocation2 + $0x30] sm:$0xff]
  %v60 = vld [vmem:[#allocation2 + $0x38] sm:$0xff]
  %v61 = vld [vmem:[#allocation2 + $0x40] sm:$0xff]
  %v62 = vld [vmem:[#allocation2 + $0x48] sm:$0xff]
  %v63 = vld [vmem:[#allocation2 + $0x50] sm:$0xff]
  %v64 = vld [vmem:[#allocation2 + $0x58] sm:$0xff]
  %v65 = vld [vmem:[#allocation2 + $0x60] sm:$0xff]
  %v66 = vld [vmem:[#allocation2 + $0x68] sm:$0xff]
  %v67 = vld [vmem:[#allocation2 + $0x70] sm:$0xff]
  %v68 = vld [vmem:[#allocation2 + $0x78] sm:$0xff]
  %v69 = vld [vmem:[%s0] sm:$0xf]
  %v70 = vld [vmem:[%s0 + $0x4] sm:$0xf]
  %v71 = vld [vmem:[%s0 + $0x8] sm:$0xf]
  %v72 = vld [vmem:[%s0 + $0xc] sm:$0xf]
  %v73 = vld [vmem:[%s0 + $0x10] sm:$0xf]
  %v74 = vld [vmem:[%s0 + $0x14] sm:$0xf]
  %v75 = vld [vmem:[%s0 + $0x18] sm:$0xf]
  %v76 = vld [vmem:[%s0 + $0x1c] sm:$0xf]
  %v77 = vld [vmem:[%s0 + $0x20] sm:$0xf]
  %v78 = vld [vmem:[%s0 + $0x24] sm:$0xf]
  %v79 = vld [vmem:[%s0 + $0x28] sm:$0xf]
  %v80 = vld [vmem:[%s0 + $0x2c] sm:$0xf]
  %v81 = vld [vmem:[%s0 + $0x30] sm:$0xf]
  %v82 = vld [vmem:[%s0 + $0x34] sm:$0xf]
  %v83 = vld [vmem:[%s0 + $0x38] sm:$0xf]
  %v84 = vld [vmem:[%s0 + $0x3c] sm:$0xf]
  %v85 = vunpack.c.l.bf16 %v69
  %v86 = vunpack.c.l.bf16 %v70
  %v87 = vunpack.c.l.bf16 %v71
  %v88 = vunpack.c.l.bf16 %v72
  %v89 = vunpack.c.l.bf16 %v73
  %v90 = vunpack.c.l.bf16 %v74
  %v91 = vunpack.c.l.bf16 %v75
  %v92 = vunpack.c.l.bf16 %v76
  %v93 = vunpack.c.l.bf16 %v77
  %v94 = vunpack.c.l.bf16 %v78
  %v95 = vunpack.c.l.bf16 %v79
  %v96 = vunpack.c.l.bf16 %v80
  %v97 = vunpack.c.l.bf16 %v81
  %v98 = vunpack.c.l.bf16 %v82
  %v99 = vunpack.c.l.bf16 %v83
  %v100 = vunpack.c.l.bf16 %v84
  %v101 = vld [vmem:[%s1] sm:$0xff]
  %v102 = vld [vmem:[%s1 + $0x8] sm:$0xff]
  %v103 = vld [vmem:[%s1 + $0x10] sm:$0xff]
  %v104 = vld [vmem:[%s1 + $0x18] sm:$0xff]
  %v105 = vld [vmem:[%s1 + $0x20] sm:$0xff]
  %v106 = vld [vmem:[%s1 + $0x28] sm:$0xff]
  %v107 = vld [vmem:[%s1 + $0x30] sm:$0xff]
  %v108 = vld [vmem:[%s1 + $0x38] sm:$0xff]
  %v109 = vld [vmem:[%s1 + $0x40] sm:$0xff]
  %v110 = vld [vmem:[%s1 + $0x48] sm:$0xff]
  %v111 = vld [vmem:[%s1 + $0x50] sm:$0xff]
  %v112 = vld [vmem:[%s1 + $0x58] sm:$0xff]
  %v113 = vld [vmem:[%s1 + $0x60] sm:$0xff]
  %v114 = vld [vmem:[%s1 + $0x68] sm:$0xff]
  %v115 = vld [vmem:[%s1 + $0x70] sm:$0xff]
  %v116 = vld [vmem:[%s1 + $0x78] sm:$0xff]
  %117 = vmatprep.subr.mxu0 0.0
  %118 = vmatpush1.msra.mxu0 %v101
  %119 = vmatprep.subr.mxu0 0.0
  %120 = vmatpush1.msra.mxu0 %v102
  %121 = vmatprep.subr.mxu0 0.0
  %122 = vmatpush1.msra.mxu0 %v103
  %123 = vmatprep.subr.mxu0 0.0
  %124 = vmatpush1.msra.mxu0 %v104
  %125 = vmatprep.subr.mxu0 0.0
  %126 = vmatpush1.msra.mxu0 %v105
  %127 = vmatprep.subr.mxu0 0.0
  %128 = vmatpush1.msra.mxu0 %v106
  %129 = vmatprep.subr.mxu0 0.0
  %130 = vmatpush1.msra.mxu0 %v107
  %131 = vmatprep.subr.mxu0 0.0
  %132 = vmatpush1.msra.mxu0 %v108
  %133 = vmatprep.subr.mxu0 0.0
  %134 = vmatpush1.msra.mxu0 %v109
  %135 = vmatprep.subr.mxu0 0.0
  %136 = vmatpush1.msra.mxu0 %v110
  %137 = vmatprep.subr.mxu0 0.0
  %138 = vmatpush1.msra.mxu0 %v111
  %139 = vmatprep.subr.mxu0 0.0
  %140 = vmatpush1.msra.mxu0 %v112
  %141 = vmatprep.subr.mxu0 0.0
  %142 = vmatpush1.msra.mxu0 %v113
  %143 = vmatprep.subr.mxu0 0.0
  %144 = vmatpush1.msra.mxu0 %v114
  %145 = vmatprep.subr.mxu0 0.0
  %146 = vmatpush1.msra.mxu0 %v115
  %147 = vmatprep.subr.mxu0 0.0
  %148 = vmatpush1.msra.mxu0 %v116
  %149 = vmatprep.subr.mxu0 0.0
  %150 = vmatpush1.msra.mxu0 0.0
  %151 = vmatprep.subr.mxu0 0.0
  %152 = vmatpush1.msra.mxu0 0.0
  %153 = vmatprep.subr.mxu0 0.0
  %154 = vmatpush1.msra.mxu0 0.0
  %155 = vmatprep.subr.mxu0 0.0
  %156 = vmatpush1.msra.mxu0 0.0
  %157 = vmatprep.subr.mxu0 0.0
  %158 = vmatpush1.msra.mxu0 0.0
  %159 = vmatprep.subr.mxu0 0.0
  %160 = vmatpush1.msra.mxu0 0.0
  %161 = vmatprep.subr.mxu0 0.0
  %162 = vmatpush1.msra.mxu0 0.0
  %163 = vmatprep.subr.mxu0 0.0
  %164 = vmatpush1.msra.mxu0 0.0
  %165 = vmatprep.subr.mxu0 0.0
  %166 = vmatpush1.msra.mxu0 0.0
  %167 = vmatprep.subr.mxu0 0.0
  %168 = vmatpush1.msra.mxu0 0.0
  %169 = vmatprep.subr.mxu0 0.0
  %170 = vmatpush1.msra.mxu0 0.0
  %171 = vmatprep.subr.mxu0 0.0
  %172 = vmatpush1.msra.mxu0 0.0
  %173 = vmatprep.subr.mxu0 0.0
  %174 = vmatpush1.msra.mxu0 0.0
  %175 = vmatprep.subr.mxu0 0.0
  %176 = vmatpush1.msra.mxu0 0.0
  %177 = vmatprep.subr.mxu0 0.0
  %178 = vmatpush1.msra.mxu0 0.0
  %179 = vmatprep.subr.mxu0 0.0
  %180 = vmatpush1.msra.mxu0 0.0
  %181 = vmatprep.mubr.f32.mxu0 0.0
  %182 = vmatmul.mubr.f32.gmra.mrb[0].mxu0 %v85
  %v183 = vpop.f32.mrb[0].mxu0
  %v184 = vadd.f32 0.0, %v183
  %v185 = vpop.f32.mrb[0].mxu0
  %186 = vmatprep.mubr.f32.mxu0 0.0
  %187 = vmatmul.mubr.f32.gmra.mrb[0].mxu0 %v86
  %v188 = vpop.f32.mrb[0].mxu0
  %v189 = vadd.f32 0.0, %v188
  %v190 = vpop.f32.mrb[0].mxu0
  %191 = vmatprep.mubr.f32.mxu0 0.0
  %192 = vmatmul.mubr.f32.gmra.mrb[0].mxu0 %v87
  %v193 = vpop.f32.mrb[0].mxu0
  %v194 = vadd.f32 0.0, %v193
  %v195 = vpop.f32.mrb[0].mxu0
  %196 = vmatprep.mubr.f32.mxu0 0.0
  %197 = vmatmul.mubr.f32.gmra.mrb[0].mxu0 %v88
  %v198 = vpop.f32.mrb[0].mxu0
  %v199 = vadd.f32 0.0, %v198
  %v200 = vpop.f32.mrb[0].mxu0
  %201 = vmatprep.mubr.f32.mxu0 0.0
  %202 = vmatmul.mubr.f32.gmra.mrb[0].mxu0 %v89
  %v203 = vpop.f32.mrb[0].mxu0
  %v204 = vadd.f32 0.0, %v203
  %v205 = vpop.f32.mrb[0].mxu0
  %206 = vmatprep.mubr.f32.mxu0 0.0
  %207 = vmatmul.mubr.f32.gmra.mrb[0].mxu0 %v90
  %v208 = vpop.f32.mrb[0].mxu0
  %v209 = vadd.f32 0.0, %v208
  %v210 = vpop.f32.mrb[0].mxu0
  %211 = vmatprep.mubr.f32.mxu0 0.0
  %212 = vmatmul.mubr.f32.gmra.mrb[0].mxu0 %v91
  %v213 = vpop.f32.mrb[0].mxu0
  %v214 = vadd.f32 0.0, %v213
  %v215 = vpop.f32.mrb[0].mxu0
  %216 = vmatprep.mubr.f32.mxu0 0.0
  %217 = vmatmul.mubr.f32.gmra.mrb[0].mxu0 %v92
  %v218 = vpop.f32.mrb[0].mxu0
  %v219 = vadd.f32 0.0, %v218
  %v220 = vpop.f32.mrb[0].mxu0
  %221 = vmatprep.mubr.f32.mxu0 0.0
  %222 = vmatmul.mubr.f32.gmra.mrb[0].mxu0 %v93
  %v223 = vpop.f32.mrb[0].mxu0
  %v224 = vadd.f32 0.0, %v223
  %v225 = vpop.f32.mrb[0].mxu0
  %226 = vmatprep.mubr.f32.mxu0 0.0
  %227 = vmatmul.mubr.f32.gmra.mrb[0].mxu0 %v94
  %v228 = vpop.f32.mrb[0].mxu0
  %v229 = vadd.f32 0.0, %v228
  %v230 = vpop.f32.mrb[0].mxu0
  %231 = vmatprep.mubr.f32.mxu0 0.0
  %232 = vmatmul.mubr.f32.gmra.mrb[0].mxu0 %v95
  %v233 = vpop.f32.mrb[0].mxu0
  %v234 = vadd.f32 0.0, %v233
  %v235 = vpop.f32.mrb[0].mxu0
  %236 = vmatprep.mubr.f32.mxu0 0.0
  %237 = vmatmul.mubr.f32.gmra.mrb[0].mxu0 %v96
  %v238 = vpop.f32.mrb[0].mxu0
  %v239 = vadd.f32 0.0, %v238
  %v240 = vpop.f32.mrb[0].mxu0
  %241 = vmatprep.mubr.f32.mxu0 0.0
  %242 = vmatmul.mubr.f32.gmra.mrb[0].mxu0 %v97
  %v243 = vpop.f32.mrb[0].mxu0
  %v244 = vadd.f32 0.0, %v243
  %v245 = vpop.f32.mrb[0].mxu0
  %246 = vmatprep.mubr.f32.mxu0 0.0
  %247 = vmatmul.mubr.f32.gmra.mrb[0].mxu0 %v98
  %v248 = vpop.f32.mrb[0].mxu0
  %v249 = vadd.f32 0.0, %v248
  %v250 = vpop.f32.mrb[0].mxu0
  %251 = vmatprep.mubr.f32.mxu0 0.0
  %252 = vmatmul.mubr.f32.gmra.mrb[0].mxu0 %v99
  %v253 = vpop.f32.mrb[0].mxu0
  %v254 = vadd.f32 0.0, %v253
  %v255 = vpop.f32.mrb[0].mxu0
  %256 = vmatprep.mubr.f32.mxu0 0.0
  %257 = vmatmul.mubr.f32.gmra.mrb[0].mxu0 %v100
  %v258 = vpop.f32.mrb[0].mxu0
  %v259 = vadd.f32 0.0, %v258
  %v260 = vpop.f32.mrb[0].mxu0
  %261 = vdwg.mxu0
  %v262 = vadd.f32 %v53, %v184
  %v263 = vadd.f32 %v54, %v189
  %v264 = vadd.f32 %v55, %v194
  %v265 = vadd.f32 %v56, %v199
  %v266 = vadd.f32 %v57, %v204
  %v267 = vadd.f32 %v58, %v209
  %v268 = vadd.f32 %v59, %v214
  %v269 = vadd.f32 %v60, %v219
  %v270 = vadd.f32 %v61, %v224
  %v271 = vadd.f32 %v62, %v229
  %v272 = vadd.f32 %v63, %v234
  %v273 = vadd.f32 %v64, %v239
  %v274 = vadd.f32 %v65, %v244
  %v275 = vadd.f32 %v66, %v249
  %v276 = vadd.f32 %v67, %v254
  %v277 = vadd.f32 %v68, %v259
  %278 = vst [vmem:[#allocation2] sm:$0xff] %v262
  %279 = vst [vmem:[#allocation2 + $0x8] sm:$0xff] %v263
  %280 = vst [vmem:[#allocation2 + $0x10] sm:$0xff] %v264
  %281 = vst [vmem:[#allocation2 + $0x18] sm:$0xff] %v265
  %282 = vst [vmem:[#allocation2 + $0x20] sm:$0xff] %v266
  %283 = vst [vmem:[#allocation2 + $0x28] sm:$0xff] %v267
  %284 = vst [vmem:[#allocation2 + $0x30] sm:$0xff] %v268
  %285 = vst [vmem:[#allocation2 + $0x38] sm:$0xff] %v269
  %286 = vst [vmem:[#allocation2 + $0x40] sm:$0xff] %v270
  %287 = vst [vmem:[#allocation2 + $0x48] sm:$0xff] %v271
  %288 = vst [vmem:[#allocation2 + $0x50] sm:$0xff] %v272
  %289 = vst [vmem:[#allocation2 + $0x58] sm:$0xff] %v273
  %290 = vst [vmem:[#allocation2 + $0x60] sm:$0xff] %v274
  %291 = vst [vmem:[#allocation2 + $0x68] sm:$0xff] %v275
  %292 = vst [vmem:[#allocation2 + $0x70] sm:$0xff] %v276
  %293 = vst [vmem:[#allocation2 + $0x78] sm:$0xff] %v277
  // Predicated region
  $region22: #{gncae_forward.8} parent=0 // pred_check
    %p294 = pneg %p17
  $region23: #{gncae_forward.8} parent=0 // pred_check_branch
    %296 = sbr.rel (%p294) target = $region25
  $region24: #{gncae_forward.8} parent=0 // pred_region
    %v297 = vld [vmem:[%s3] sm:$0xff]
    %v298 = vld [vmem:[%s3 + $0x8] sm:$0xff]
    %v299 = vld [vmem:[%s3 + $0x10] sm:$0xff]
    %v300 = vld [vmem:[%s3 + $0x18] sm:$0xff]
    %v301 = vld [vmem:[%s3 + $0x20] sm:$0xff]
    %v302 = vld [vmem:[%s3 + $0x28] sm:$0xff]
    %v303 = vld [vmem:[%s3 + $0x30] sm:$0xff]
    %v304 = vld [vmem:[%s3 + $0x38] sm:$0xff]
    %v305 = vld [vmem:[%s3 + $0x40] sm:$0xff]
    %v306 = vld [vmem:[%s3 + $0x48] sm:$0xff]
    %v307 = vld [vmem:[%s3 + $0x50] sm:$0xff]
    %v308 = vld [vmem:[%s3 + $0x58] sm:$0xff]
    %v309 = vld [vmem:[%s3 + $0x60] sm:$0xff]
    %v310 = vld [vmem:[%s3 + $0x68] sm:$0xff]
    %v311 = vld [vmem:[%s3 + $0x70] sm:$0xff]
    %v312 = vld [vmem:[%s3 + $0x78] sm:$0xff]
    %v313 = vld [vmem:[#allocation2] sm:$0xff]
    %v314 = vld [vmem:[#allocation2 + $0x8] sm:$0xff]
    %v315 = vld [vmem:[#allocation2 + $0x10] sm:$0xff]
    %v316 = vld [vmem:[#allocation2 + $0x18] sm:$0xff]
    %v317 = vld [vmem:[#allocation2 + $0x20] sm:$0xff]
    %v318 = vld [vmem:[#allocation2 + $0x28] sm:$0xff]
    %v319 = vld [vmem:[#allocation2 + $0x30] sm:$0xff]
    %v320 = vld [vmem:[#allocation2 + $0x38] sm:$0xff]
    %v321 = vld [vmem:[#allocation2 + $0x40] sm:$0xff]
    %v322 = vld [vmem:[#allocation2 + $0x48] sm:$0xff]
    %v323 = vld [vmem:[#allocation2 + $0x50] sm:$0xff]
    %v324 = vld [vmem:[#allocation2 + $0x58] sm:$0xff]
    %v325 = vld [vmem:[#allocation2 + $0x60] sm:$0xff]
    %v326 = vld [vmem:[#allocation2 + $0x68] sm:$0xff]
    %v327 = vld [vmem:[#allocation2 + $0x70] sm:$0xff]
    %v328 = vld [vmem:[#allocation2 + $0x78] sm:$0xff]
    %330 = vset.pattern.permute.xlu0 0
    %331 = vperm.xlu0 %330, %v297
    %v332 = vpop.permute.xlu0 %331
    %335 = vset.pattern.permute.xlu0 0
    %336 = vperm.xlu0 %335, %v298
    %v337 = vpop.permute.xlu0 %336
    %340 = vset.pattern.permute.xlu0 0
    %341 = vperm.xlu0 %340, %v299
    %v342 = vpop.permute.xlu0 %341
    %345 = vset.pattern.permute.xlu0 0
    %346 = vperm.xlu0 %345, %v300
    %v347 = vpop.permute.xlu0 %346
    %350 = vset.pattern.permute.xlu0 0
    %351 = vperm.xlu0 %350, %v301
    %v352 = vpop.permute.xlu0 %351
    %355 = vset.pattern.permute.xlu0 0
    %356 = vperm.xlu0 %355, %v302
    %v357 = vpop.permute.xlu0 %356
    %360 = vset.pattern.permute.xlu0 0
    %361 = vperm.xlu0 %360, %v303
    %v362 = vpop.permute.xlu0 %361
    %365 = vset.pattern.permute.xlu0 0
    %366 = vperm.xlu0 %365, %v304
    %v367 = vpop.permute.xlu0 %366
    %370 = vset.pattern.permute.xlu0 0
    %371 = vperm.xlu0 %370, %v305
    %v372 = vpop.permute.xlu0 %371
    %375 = vset.pattern.permute.xlu0 0
    %376 = vperm.xlu0 %375, %v306
    %v377 = vpop.permute.xlu0 %376
    %380 = vset.pattern.permute.xlu0 0
    %381 = vperm.xlu0 %380, %v307
    %v382 = vpop.permute.xlu0 %381
    %385 = vset.pattern.permute.xlu0 0
    %386 = vperm.xlu0 %385, %v308
    %v387 = vpop.permute.xlu0 %386
    %390 = vset.pattern.permute.xlu0 0
    %391 = vperm.xlu0 %390, %v309
    %v392 = vpop.permute.xlu0 %391
    %395 = vset.pattern.permute.xlu0 0
    %396 = vperm.xlu0 %395, %v310
    %v397 = vpop.permute.xlu0 %396
    %400 = vset.pattern.permute.xlu0 0
    %401 = vperm.xlu0 %400, %v311
    %v402 = vpop.permute.xlu0 %401
    %405 = vset.pattern.permute.xlu0 0
    %406 = vperm.xlu0 %405, %v312
    %v407 = vpop.permute.xlu0 %406
    %v409 = vmul.f32 %v332, %v313
    %v410 = vmul.f32 %v337, %v314
    %v411 = vmul.f32 %v342, %v315
    %v412 = vmul.f32 %v347, %v316
    %v413 = vmul.f32 %v352, %v317
    %v414 = vmul.f32 %v357, %v318
    %v415 = vmul.f32 %v362, %v319
    %v416 = vmul.f32 %v367, %v320
    %v417 = vmul.f32 %v372, %v321
    %v418 = vmul.f32 %v377, %v322
    %v419 = vmul.f32 %v382, %v323
    %v420 = vmul.f32 %v387, %v324
    %v421 = vmul.f32 %v392, %v325
    %v422 = vmul.f32 %v397, %v326
    %v423 = vmul.f32 %v402, %v327
    %v424 = vmul.f32 %v407, %v328
    %425 = vst [vmem:[%s4] sm:$0xff] %v409
    %426 = vst [vmem:[%s4 + $0x8] sm:$0xff] %v410
    %427 = vst [vmem:[%s4 + $0x10] sm:$0xff] %v411
    %428 = vst [vmem:[%s4 + $0x18] sm:$0xff] %v412
    %429 = vst [vmem:[%s4 + $0x20] sm:$0xff] %v413
    %430 = vst [vmem:[%s4 + $0x28] sm:$0xff] %v414
    %431 = vst [vmem:[%s4 + $0x30] sm:$0xff] %v415
    %432 = vst [vmem:[%s4 + $0x38] sm:$0xff] %v416
    %433 = vst [vmem:[%s4 + $0x40] sm:$0xff] %v417
    %434 = vst [vmem:[%s4 + $0x48] sm:$0xff] %v418
    %435 = vst [vmem:[%s4 + $0x50] sm:$0xff] %v419
    %436 = vst [vmem:[%s4 + $0x58] sm:$0xff] %v420
    %437 = vst [vmem:[%s4 + $0x60] sm:$0xff] %v421
    %438 = vst [vmem:[%s4 + $0x68] sm:$0xff] %v422
    %439 = vst [vmem:[%s4 + $0x70] sm:$0xff] %v423
    %440 = vst [vmem:[%s4 + $0x78] sm:$0xff] %v424
  $region25: #{gncae_forward.8} parent=0 // pred_fallthru
    _
  // Predicated region
  $region26: #{gncae_forward.8} parent=0 // pred_check
    _
  $region27: #{gncae_forward.8} parent=0 // pred_check_branch
    %442 = sbr.rel (0) target = $region29
  $region28: #{gncae_forward.8} parent=0 // pred_region
    _
  $region29: #{gncae_forward.8} parent=0 // pred_fallthru
    _
  // Predicated region
  $region30: #{gncae_forward.8} parent=0 // pred_check
    _
  $region31: #{gncae_forward.8} parent=0 // pred_check_branch
    %444 = sbr.rel (0) target = $region33
  $region32: #{gncae_forward.8} parent=0 // pred_region
    _
  $region33: #{gncae_forward.8} parent=0 // pred_fallthru
    _

</llo_original>
